<compile_context>
chip_gen: v7x
topology: tpu7x:2x2x1
jax: 0.10.0
libtpu: 0.0.40
codegen_flags: <defaults>
</compile_context>

<pallas_src>
import functools

import jax
import jax.numpy as jnp
from jax.experimental import pallas as pl
from jax.experimental.pallas import tpu as pltpu


def graph_embedding_kernel(a_ref, h_ref,
                           repl_ref, mask_ref,
                           w1_ref, b1_ref,
                           w2_ref, b2_ref,
                           w3_ref, b3_ref,
                           pool_ref,
                           out_ref,
                           *, compute_dtype):
    # a_ref:    (G*N, N)    row-compact normalized adjacency rows for G graphs (streamed)
    # h_ref:    (G*N, Fin)  node features for G graphs (streamed)
    # repl_ref: (N, G*N)    tile(eye(N), (1, G)) lane replicator          (resident)
    # mask_ref: (G*N, G*N)  0/1 block-diagonal mask                        (resident)
    # pool_ref: (G, G*N)    per-graph (1/N) mean-pool matrix               (resident)
    a_rows = a_ref[...].astype(compute_dtype)                       # (GN, N)

    # Build the (GN, GN) block-diagonal adjacency on-chip, once, reused by all 3 layers.
    a_bd = jnp.dot(a_rows, repl_ref[...].astype(compute_dtype),
                   preferred_element_type=jnp.float32) * mask_ref[...]
    a_bd = a_bd.astype(compute_dtype)                                # (GN, GN)

    def gconv(x, w_ref, b_ref):
        # Message passing for all G graphs: one lane/sublane-dense MXU matmul,
        # then one fused feature matmul + bias + ReLU (f32 accumulation).
        z = jnp.dot(a_bd, x, preferred_element_type=jnp.float32)            # (GN, F_in)
        y = jnp.dot(z.astype(compute_dtype), w_ref[...].astype(compute_dtype),
                    preferred_element_type=jnp.float32) + b_ref[...]        # (GN, F_out)
        return jnp.maximum(y, 0.0).astype(compute_dtype)

    h1 = gconv(h_ref[...].astype(compute_dtype), w1_ref, b1_ref)    # (GN, H)
    h2 = gconv(h1, w2_ref, b2_ref)                                   # (GN, H)
    h3 = gconv(h2, w3_ref, b3_ref)                                   # (GN, Hp)  lane-dense

    # dgl.mean_nodes: per-graph segment mean as a block (1/N) pooling matmul.
    out_ref[...] = jnp.dot(pool_ref[...].astype(compute_dtype), h3,
                           preferred_element_type=jnp.float32)       # (G, Hp) f32


def graph_embedding(a_hat, h, params, *, graphs_per_block=8,
                    compute_dtype=jnp.float32):
    """a_hat: (B,N,N), h: (B,N,Fin), params: dict w1,b1,w2,b2,w3,b3 -> (B,H)."""
    B, N, Fin = h.shape
    H = params["w1"].shape[1]
    G = min(graphs_per_block, B)
    assert B % G == 0, "batch must be divisible by graphs_per_block"
    GN = G * N
    assert GN % 8 == 0, "G*N must be sublane aligned"
    num_blocks = B // G

    # Pad the last layer's output dim to a lane-dense multiple of 128 so the HBM
    # writeback is unmasked; padded columns are exactly zero (zero W cols, zero bias).
    Hp = pl.cdiv(H, 128) * 128
    w3p = jnp.zeros((H, Hp), jnp.float32).at[:, :H].set(params["w3"])
    b3p = jnp.zeros((1, Hp), jnp.float32).at[:, :H].set(params["b3"])

    # Small resident operands (built once, stay in VMEM across grid steps):
    repl = jnp.tile(jnp.eye(N, dtype=jnp.float32), (1, G))                    # (N, GN)
    gid = jnp.arange(GN, dtype=jnp.int32) // N
    mask = (gid[:, None] == gid[None, :]).astype(jnp.float32)                 # (GN, GN)
    pool = jnp.kron(jnp.eye(G, dtype=jnp.float32),
                    jnp.full((1, N), 1.0 / N, dtype=jnp.float32))             # (G, GN)

    # Row-compact 2-D layouts so the kernel needs no in-kernel input reshapes.
    a2 = a_hat.reshape(B * N, N)
    h2 = h.reshape(B * N, Fin)

    kernel = functools.partial(graph_embedding_kernel, compute_dtype=compute_dtype)

    out_padded = pl.pallas_call(
        kernel,
        out_shape=jax.ShapeDtypeStruct((B, Hp), jnp.float32),
        grid_spec=pltpu.PrefetchScalarGridSpec(
            num_scalar_prefetch=0,
            grid=(num_blocks,),
            in_specs=[
                pl.BlockSpec((GN, N), lambda i: (i, 0)),       # adjacency rows (streamed)
                pl.BlockSpec((GN, Fin), lambda i: (i, 0)),     # features       (streamed)
                pl.BlockSpec((N, GN), lambda i: (0, 0)),       # replicator     (resident)
                pl.BlockSpec((GN, GN), lambda i: (0, 0)),      # block-diag mask(resident)
                pl.BlockSpec((Fin, H), lambda i: (0, 0)),      # w1             (resident)
                pl.BlockSpec((1, H), lambda i: (0, 0)),        # b1
                pl.BlockSpec((H, H), lambda i: (0, 0)),        # w2
                pl.BlockSpec((1, H), lambda i: (0, 0)),        # b2
                pl.BlockSpec((H, Hp), lambda i: (0, 0)),       # w3 (lane-padded)
                pl.BlockSpec((1, Hp), lambda i: (0, 0)),       # b3 (lane-padded)
                pl.BlockSpec((G, GN), lambda i: (0, 0)),       # pooling matrix
            ],
            out_specs=pl.BlockSpec((G, Hp), lambda i: (i, 0)),
        ),
        compiler_params=pltpu.CompilerParams(
            dimension_semantics=("parallel",),
        ),
    )(a2, h2, repl, mask, params["w1"], params["b1"], params["w2"], params["b2"],
      w3p, b3p, pool)

    return out_padded[:, :H]


def xavier_normal(key, shape):
    fan_in, fan_out = shape[0], shape[1]
    std = (2.0 / (fan_in + fan_out)) ** 0.5
    return std * jax.random.normal(key, shape, dtype=jnp.float32)


def make_params(key, in_dim, hidden_dim):
    k1, k2, k3 = jax.random.split(key, 3)
    return {
        "w1": xavier_normal(k1, (in_dim, hidden_dim)),
        "b1": jnp.zeros((1, hidden_dim), jnp.float32),   # DGL GraphConv bias init = zeros
        "w2": xavier_normal(k2, (hidden_dim, hidden_dim)),
        "b2": jnp.zeros((1, hidden_dim), jnp.float32),
        "w3": xavier_normal(k3, (hidden_dim, hidden_dim)),
        "b3": jnp.zeros((1, hidden_dim), jnp.float32),
    }


def make_graphs(key, batch, n_nodes):
    """Random undirected graphs with self-loops; return D^{-1/2} A D^{-1/2}."""
    a = jax.random.bernoulli(key, 0.3, (batch, n_nodes, n_nodes)).astype(jnp.float32)
    a = jnp.maximum(a, jnp.swapaxes(a, 1, 2))                       # symmetrize
    a = jnp.maximum(a, jnp.eye(n_nodes, dtype=jnp.float32)[None])   # self loops
    deg = jnp.sum(a, axis=-1)
    d_inv_sqrt = 1.0 / jnp.sqrt(deg)
    return a * d_inv_sqrt[:, :, None] * d_inv_sqrt[:, None, :]


def reference(a_hat, h, p):
    def gc(a, x, w, b):
        return jnp.maximum(jnp.einsum("nm,mf->nf", a, x) @ w + b, 0.0)
    outs = []
    for i in range(h.shape[0]):
        x = gc(a_hat[i], h[i], p["w1"], p["b1"])
        x = gc(a_hat[i], x, p["w2"], p["b2"])
        x = gc(a_hat[i], x, p["w3"], p["b3"])
        outs.append(jnp.mean(x, axis=0))
    return jnp.stack(outs)


if __name__ == "__main__":
    # B=16 graphs, G=8 per grid step -> grid of 2 (both v7x TCs busy); G*N = 128 lane-dense.
    B, N, IN_DIM, HIDDEN = 16, 16, 8, 32
    key = jax.random.PRNGKey(0)
    k_graph, k_feat, k_param = jax.random.split(key, 3)

    a_hat = make_graphs(k_graph, B, N)
    h = jax.random.normal(k_feat, (B, N, IN_DIM), dtype=jnp.float32)
    params = make_params(k_param, IN_DIM, HIDDEN)

    # compute_dtype=jnp.bfloat16 is recommended on v6e/v7x (f32 accumulation kept),
    # but default f32 preserves the 1e-4 reference tolerance used below.
    out = graph_embedding(a_hat, h, params, graphs_per_block=8)
    out = jax.block_until_ready(out)

    ref = reference(a_hat, h, params)
    assert out.shape == (B, HIDDEN)
    assert jnp.allclose(out, ref, atol=1e-4, rtol=1e-4)
    print("KERNEL_OK")
</pallas_src>

<mosaic_0001>
module attributes {stable_mosaic.version = 11 : i64} {
  func.func @graph_embedding_kernel(%arg0: i32, %arg1: memref<128x16xf32, #tpu.memory_space<vmem>>, %arg2: memref<128x8xf32, #tpu.memory_space<vmem>>, %arg3: memref<16x128xf32, #tpu.memory_space<vmem>>, %arg4: memref<128x128xf32, #tpu.memory_space<vmem>>, %arg5: memref<8x32xf32, #tpu.memory_space<vmem>>, %arg6: memref<1x32xf32, #tpu.memory_space<vmem>>, %arg7: memref<32x32xf32, #tpu.memory_space<vmem>>, %arg8: memref<1x32xf32, #tpu.memory_space<vmem>>, %arg9: memref<32x128xf32, #tpu.memory_space<vmem>>, %arg10: memref<1x128xf32, #tpu.memory_space<vmem>>, %arg11: memref<8x128xf32, #tpu.memory_space<vmem>>, %arg12: memref<8x128xf32, #tpu.memory_space<vmem>>) attributes {dimension_semantics = [#tpu.dimension_semantics<parallel>], iteration_bounds = array<i64: 2>, scalar_prefetch = 0 : i64, scratch_operands = 0 : i64, tpu.core_type = #tpu.core_type<tc>, window_params = [{transform_indices = @transform_0, window_bounds = array<i64: 128, 16>}, {transform_indices = @transform_1, window_bounds = array<i64: 128, 8>}, {pipeline_mode = #tpu.pipeline_mode<synchronous>, transform_indices = @transform_2, window_bounds = array<i64: 16, 128>}, {pipeline_mode = #tpu.pipeline_mode<synchronous>, transform_indices = @transform_3, window_bounds = array<i64: 128, 128>}, {pipeline_mode = #tpu.pipeline_mode<synchronous>, transform_indices = @transform_4, window_bounds = array<i64: 8, 32>}, {pipeline_mode = #tpu.pipeline_mode<synchronous>, transform_indices = @transform_5, window_bounds = array<i64: 1, 32>}, {pipeline_mode = #tpu.pipeline_mode<synchronous>, transform_indices = @transform_6, window_bounds = array<i64: 32, 32>}, {pipeline_mode = #tpu.pipeline_mode<synchronous>, transform_indices = @transform_7, window_bounds = array<i64: 1, 32>}, {pipeline_mode = #tpu.pipeline_mode<synchronous>, transform_indices = @transform_8, window_bounds = array<i64: 32, 128>}, {pipeline_mode = #tpu.pipeline_mode<synchronous>, transform_indices = @transform_9, window_bounds = array<i64: 1, 128>}, {pipeline_mode = #tpu.pipeline_mode<synchronous>, transform_indices = @transform_10, window_bounds = array<i64: 8, 128>}, {transform_indices = @transform_11, window_bounds = array<i64: 8, 128>}]} {
    %c0 = arith.constant 0 : index
    %c0_0 = arith.constant 0 : index
    %0 = vector.load %arg1[%c0, %c0_0] : memref<128x16xf32, #tpu.memory_space<vmem>>, vector<128x16xf32>
    %c0_1 = arith.constant 0 : index
    %c0_2 = arith.constant 0 : index
    %1 = vector.load %arg3[%c0_1, %c0_2] : memref<16x128xf32, #tpu.memory_space<vmem>>, vector<16x128xf32>
    %cst = arith.constant dense<0.000000e+00> : vector<128x128xf32>
    %2 = tpu.matmul %0, %1, %cst {dimension_numbers = #tpu.dot_dimension_numbers<[1], [0], [0], [1], [0, 0, 1, 1], [], []>} : vector<128x16xf32>, vector<16x128xf32>, vector<128x128xf32> -> vector<128x128xf32>
    %c0_3 = arith.constant 0 : index
    %c0_4 = arith.constant 0 : index
    %3 = vector.load %arg4[%c0_3, %c0_4] : memref<128x128xf32, #tpu.memory_space<vmem>>, vector<128x128xf32>
    %4 = arith.mulf %2, %3 : vector<128x128xf32>
    %c0_5 = arith.constant 0 : index
    %c0_6 = arith.constant 0 : index
    %5 = vector.load %arg2[%c0_5, %c0_6] : memref<128x8xf32, #tpu.memory_space<vmem>>, vector<128x8xf32>
    %cst_7 = arith.constant dense<0.000000e+00> : vector<128x8xf32>
    %6 = tpu.matmul %4, %5, %cst_7 {dimension_numbers = #tpu.dot_dimension_numbers<[1], [0], [0], [1], [0, 0, 1, 1], [], []>} : vector<128x128xf32>, vector<128x8xf32>, vector<128x8xf32> -> vector<128x8xf32>
    %c0_8 = arith.constant 0 : index
    %c0_9 = arith.constant 0 : index
    %7 = vector.load %arg5[%c0_8, %c0_9] : memref<8x32xf32, #tpu.memory_space<vmem>>, vector<8x32xf32>
    %cst_10 = arith.constant dense<0.000000e+00> : vector<128x32xf32>
    %8 = tpu.matmul %6, %7, %cst_10 {dimension_numbers = #tpu.dot_dimension_numbers<[1], [0], [0], [1], [0, 0, 1, 1], [], []>} : vector<128x8xf32>, vector<8x32xf32>, vector<128x32xf32> -> vector<128x32xf32>
    %c0_11 = arith.constant 0 : index
    %c0_12 = arith.constant 0 : index
    %9 = vector.load %arg6[%c0_11, %c0_12] : memref<1x32xf32, #tpu.memory_space<vmem>>, vector<1x32xf32>
    %10 = vector.broadcast %9 : vector<1x32xf32> to vector<128x32xf32>
    %11 = arith.addf %8, %10 : vector<128x32xf32>
    %cst_13 = arith.constant 0.000000e+00 : f32
    %12 = vector.broadcast %cst_13 : f32 to vector<128x32xf32>
    %13 = arith.maximumf %11, %12 : vector<128x32xf32>
    %cst_14 = arith.constant dense<0.000000e+00> : vector<128x32xf32>
    %14 = tpu.matmul %4, %13, %cst_14 {dimension_numbers = #tpu.dot_dimension_numbers<[1], [0], [0], [1], [0, 0, 1, 1], [], []>} : vector<128x128xf32>, vector<128x32xf32>, vector<128x32xf32> -> vector<128x32xf32>
    %c0_15 = arith.constant 0 : index
    %c0_16 = arith.constant 0 : index
    %15 = vector.load %arg7[%c0_15, %c0_16] : memref<32x32xf32, #tpu.memory_space<vmem>>, vector<32x32xf32>
    %cst_17 = arith.constant dense<0.000000e+00> : vector<128x32xf32>
    %16 = tpu.matmul %14, %15, %cst_17 {dimension_numbers = #tpu.dot_dimension_numbers<[1], [0], [0], [1], [0, 0, 1, 1], [], []>} : vector<128x32xf32>, vector<32x32xf32>, vector<128x32xf32> -> vector<128x32xf32>
    %c0_18 = arith.constant 0 : index
    %c0_19 = arith.constant 0 : index
    %17 = vector.load %arg8[%c0_18, %c0_19] : memref<1x32xf32, #tpu.memory_space<vmem>>, vector<1x32xf32>
    %18 = vector.broadcast %17 : vector<1x32xf32> to vector<128x32xf32>
    %19 = arith.addf %16, %18 : vector<128x32xf32>
    %cst_20 = arith.constant 0.000000e+00 : f32
    %20 = vector.broadcast %cst_20 : f32 to vector<128x32xf32>
    %21 = arith.maximumf %19, %20 : vector<128x32xf32>
    %cst_21 = arith.constant dense<0.000000e+00> : vector<128x32xf32>
    %22 = tpu.matmul %4, %21, %cst_21 {dimension_numbers = #tpu.dot_dimension_numbers<[1], [0], [0], [1], [0, 0, 1, 1], [], []>} : vector<128x128xf32>, vector<128x32xf32>, vector<128x32xf32> -> vector<128x32xf32>
    %c0_22 = arith.constant 0 : index
    %c0_23 = arith.constant 0 : index
    %23 = vector.load %arg9[%c0_22, %c0_23] : memref<32x128xf32, #tpu.memory_space<vmem>>, vector<32x128xf32>
    %cst_24 = arith.constant dense<0.000000e+00> : vector<128x128xf32>
    %24 = tpu.matmul %22, %23, %cst_24 {dimension_numbers = #tpu.dot_dimension_numbers<[1], [0], [0], [1], [0, 0, 1, 1], [], []>} : vector<128x32xf32>, vector<32x128xf32>, vector<128x128xf32> -> vector<128x128xf32>
    %c0_25 = arith.constant 0 : index
    %c0_26 = arith.constant 0 : index
    %25 = vector.load %arg10[%c0_25, %c0_26] : memref<1x128xf32, #tpu.memory_space<vmem>>, vector<1x128xf32>
    %26 = vector.broadcast %25 : vector<1x128xf32> to vector<128x128xf32>
    %27 = arith.addf %24, %26 : vector<128x128xf32>
    %cst_27 = arith.constant 0.000000e+00 : f32
    %28 = vector.broadcast %cst_27 : f32 to vector<128x128xf32>
    %29 = arith.maximumf %27, %28 : vector<128x128xf32>
    %c0_28 = arith.constant 0 : index
    %c0_29 = arith.constant 0 : index
    %30 = vector.load %arg11[%c0_28, %c0_29] : memref<8x128xf32, #tpu.memory_space<vmem>>, vector<8x128xf32>
    %cst_30 = arith.constant dense<0.000000e+00> : vector<8x128xf32>
    %31 = tpu.matmul %30, %29, %cst_30 {dimension_numbers = #tpu.dot_dimension_numbers<[1], [0], [0], [1], [0, 0, 1, 1], [], []>} : vector<8x128xf32>, vector<128x128xf32>, vector<8x128xf32> -> vector<8x128xf32>
    %c0_31 = arith.constant 0 : index
    %c0_32 = arith.constant 0 : index
    %32 = vector.load %arg12[%c0_31, %c0_32] : memref<8x128xf32, #tpu.memory_space<vmem>>, vector<8x128xf32>
    tpu.vector_store %arg12[%c0_31, %c0_32], %31 {strides = array<i32>} : memref<8x128xf32, #tpu.memory_space<vmem>>, vector<8x128xf32>,
    return
  }
  func.func @transform_0(%arg0: i32) -> (i32, i32) {
    %c0_i32 = arith.constant 0 : i32
    %c0_i32_0 = arith.constant 0 : i32
    return %arg0, %c0_i32 : i32, i32
  }
  func.func @transform_1(%arg0: i32) -> (i32, i32) {
    %c0_i32 = arith.constant 0 : i32
    %c0_i32_0 = arith.constant 0 : i32
    return %arg0, %c0_i32 : i32, i32
  }
  func.func @transform_2(%arg0: i32) -> (i32, i32) {
    %c0_i32 = arith.constant 0 : i32
    %c0_i32_0 = arith.constant 0 : i32
    %c0_i32_1 = arith.constant 0 : i32
    return %c0_i32, %c0_i32_0 : i32, i32
  }
  func.func @transform_3(%arg0: i32) -> (i32, i32) {
    %c0_i32 = arith.constant 0 : i32
    %c0_i32_0 = arith.constant 0 : i32
    %c0_i32_1 = arith.constant 0 : i32
    return %c0_i32, %c0_i32_0 : i32, i32
  }
  func.func @transform_4(%arg0: i32) -> (i32, i32) {
    %c0_i32 = arith.constant 0 : i32
    %c0_i32_0 = arith.constant 0 : i32
    %c0_i32_1 = arith.constant 0 : i32
    return %c0_i32, %c0_i32_0 : i32, i32
  }
  func.func @transform_5(%arg0: i32) -> (i32, i32) {
    %c0_i32 = arith.constant 0 : i32
    %c0_i32_0 = arith.constant 0 : i32
    %c0_i32_1 = arith.constant 0 : i32
    return %c0_i32, %c0_i32_0 : i32, i32
  }
  func.func @transform_6(%arg0: i32) -> (i32, i32) {
    %c0_i32 = arith.constant 0 : i32
    %c0_i32_0 = arith.constant 0 : i32
    %c0_i32_1 = arith.constant 0 : i32
    return %c0_i32, %c0_i32_0 : i32, i32
  }
  func.func @transform_7(%arg0: i32) -> (i32, i32) {
    %c0_i32 = arith.constant 0 : i32
    %c0_i32_0 = arith.constant 0 : i32
    %c0_i32_1 = arith.constant 0 : i32
    return %c0_i32, %c0_i32_0 : i32, i32
  }
  func.func @transform_8(%arg0: i32) -> (i32, i32) {
    %c0_i32 = arith.constant 0 : i32
    %c0_i32_0 = arith.constant 0 : i32
    %c0_i32_1 = arith.constant 0 : i32
    return %c0_i32, %c0_i32_0 : i32, i32
  }
  func.func @transform_9(%arg0: i32) -> (i32, i32) {
    %c0_i32 = arith.constant 0 : i32
    %c0_i32_0 = arith.constant 0 : i32
    %c0_i32_1 = arith.constant 0 : i32
    return %c0_i32, %c0_i32_0 : i32, i32
  }
  func.func @transform_10(%arg0: i32) -> (i32, i32) {
    %c0_i32 = arith.constant 0 : i32
    %c0_i32_0 = arith.constant 0 : i32
    %c0_i32_1 = arith.constant 0 : i32
    return %c0_i32, %c0_i32_0 : i32, i32
  }
  func.func @transform_11(%arg0: i32) -> (i32, i32) {
    %c0_i32 = arith.constant 0 : i32
    %c0_i32_0 = arith.constant 0 : i32
    return %arg0, %c0_i32 : i32, i32
  }
}

</mosaic_0001>

<llo_original>
// kernel: tpu_custom_call.1
$region0: #{tpu_custom_call.1}
  #allocation0 [shape = 'u32[]', space=smem, size = 0x4, offset = 0x4, fixed_abs, tag = 'smem constant byte address 0x4 - core index']
  #allocation1 [shape = 'u32[144,128]{1,0:T(1,128)}', space=vmem, size = 0x12000, scoped, tag = 'internal scratch']
  %s0 = inlined_call_operand.vmem [shape: f32[256,16], index: 0, kind: input, shape index: {}]
  %s1 = inlined_call_operand.vmem [shape: f32[256,8], index: 1, kind: input, shape index: {}]
  %s2 = inlined_call_operand.vmem [shape: f32[16,128], index: 2, kind: input, shape index: {}]
  %s3 = inlined_call_operand.vmem [shape: f32[128,128], index: 3, kind: input, shape index: {}]
  %s4 = inlined_call_operand.vmem [shape: f32[8,32], index: 4, kind: input, shape index: {}]
  %s5 = inlined_call_operand.vmem [shape: f32[1,32], index: 5, kind: input, shape index: {}]
  %s6 = inlined_call_operand.vmem [shape: f32[32,32], index: 6, kind: input, shape index: {}]
  %s7 = inlined_call_operand.vmem [shape: f32[1,32], index: 7, kind: input, shape index: {}]
  %s8 = inlined_call_operand.vmem [shape: f32[32,128], index: 8, kind: input, shape index: {}]
  %s9 = inlined_call_operand.vmem [shape: f32[1,128], index: 9, kind: input, shape index: {}]
  %s10 = inlined_call_operand.vmem [shape: f32[8,128], index: 10, kind: input, shape index: {}]
  %s11 = inlined_call_operand.hbm [shape: f32[16,128], index: 11, kind: output, shape index: {}]
  %s12 = sld [smem:[#allocation0]]
  $region77: #{tpu_custom_call.1} parent=0
    _
  %s14 = ssub.s32 1, %s12
  %s15 = scalar_select 0, %s14, %s12
  $region1: #{tpu_custom_call.1} parent=0
    #allocation2 [shape = 'u8[8192]{0}', space=vmem, size = 0x2000, scoped, tag = 'output window, operand 0']
    #allocation3 [shape = 's32[2]{0}', space=sflag, size = 0x8, scoped, tag = 'scoped memory for tpu_custom_call.1']
    %16 = vsyncpa [#allocation3], 0
    %s17 = scalar_lea.sflag [#allocation3], 1
    %18 = vsyncpa %s17, 0
    loop: start=0, step=1, limit=4
    $region2: #{tpu_custom_call.1} parent=1 // loop_pre_header
      _
    $region3: #{tpu_custom_call.1} parent=1 // loop_header
      %s20 = sphi 0, %s24
      %p21 = scmp.ge.s32.totalorder %s20, 4
      %s30 = sphi 0, %s32
      %s33 = sphi 0, %s30
      %s34 = sphi 0, %s33
      %s50 = sphi 0, %s34
      %s56 = sphi 0, %s58
      %s59 = sphi 0, %s56
      %s60 = sphi 0, %s59
      %s76 = sphi 0, %s60
      %s80 = sphi 0, %s80
      %s82 = sphi 0, %s80
      %s83 = sphi 0, %s82
      %s97 = sphi 0, %s83
      %s101 = sphi 0, %s101
      %s103 = sphi 0, %s101
      %s104 = sphi 0, %s103
      %s118 = sphi 0, %s104
      %s122 = sphi 0, %s122
      %s124 = sphi 0, %s122
      %s125 = sphi 0, %s124
      %s139 = sphi 0, %s125
      %s143 = sphi 0, %s143
      %s145 = sphi 0, %s143
      %s146 = sphi 0, %s145
      %s160 = sphi 0, %s146
      %s164 = sphi 0, %s164
      %s166 = sphi 0, %s164
      %s167 = sphi 0, %s166
      %s181 = sphi 0, %s167
      %s185 = sphi 0, %s185
      %s187 = sphi 0, %s185
      %s188 = sphi 0, %s187
      %s202 = sphi 0, %s188
      %s206 = sphi 0, %s206
      %s208 = sphi 0, %s206
      %s209 = sphi 0, %s208
      %s223 = sphi 0, %s209
      %s227 = sphi 0, %s227
      %s229 = sphi 0, %s227
      %s230 = sphi 0, %s229
      %s244 = sphi 0, %s230
      %s248 = sphi 0, %s248
      %s250 = sphi 0, %s248
      %s251 = sphi 0, %s250
      %s265 = sphi 0, %s251
      %s271 = sphi 0, %s273
      %s274 = sphi 0, %s271
      %s275 = sphi 0, %s274
      %s291 = sphi 0, %s275
    $region4: #{tpu_custom_call.1} parent=1 // loop_header_branch
      %23 = sbr.rel (%p21) target = $region8
    $region5: #{tpu_custom_call.1} parent=1 // loop_body
      %s25 = ssub.s32 %s20, 1
      %s26 = ssub.s32 %s20, 2
      %s27 = sadd.s32 %s20, 1
      %s28 = ssub.s32 %s20, %s27
      %p29 = scmp.eq.s32.totalorder %s28, 0
      %s31 = sadd.s32 %s30, 1
      %s32 = scalar_select %p29, %s30, %s31
      %p35 = pneg %p29
      %p36 = scmp.eq.s32.totalorder %s20, 1
      %p37 = por %p35, %p36
      %p38 = scmp.ne.s32.totalorder %s30, %s33
      %p39 = scmp.eq.s32.totalorder %s20, 0
      %p40 = por %p38, %p39
      %p41 = scmp.ne.s32.totalorder %s30, %s33
      %p42 = scmp.eq.s32.totalorder %s25, 1
      %p43 = por %p41, %p42
      %p44 = scmp.ne.s32.totalorder %s33, %s34
      %p45 = scmp.eq.s32.totalorder %s25, 0
      %p46 = por %p44, %p45
      %p47 = scmp.ne.s32.totalorder %s33, %s34
      %p48 = scmp.eq.s32.totalorder %s26, 1
      %p49 = por %p47, %p48
      %p51 = scmp.ne.s32.totalorder %s34, %s50
      %p52 = scmp.eq.s32.totalorder %s26, 0
      %p53 = por %p51, %p52
      %s54 = ssub.s32 %s20, %s27
      %p55 = scmp.eq.s32.totalorder %s54, 0
      %s57 = sadd.s32 %s56, 1
      %s58 = scalar_select %p55, %s56, %s57
      %p61 = pneg %p55
      %p62 = scmp.eq.s32.totalorder %s20, 1
      %p63 = por %p61, %p62
      %p64 = scmp.ne.s32.totalorder %s56, %s59
      %p65 = scmp.eq.s32.totalorder %s20, 0
      %p66 = por %p64, %p65
      %p67 = scmp.ne.s32.totalorder %s56, %s59
      %p68 = scmp.eq.s32.totalorder %s25, 1
      %p69 = por %p67, %p68
      %p70 = scmp.ne.s32.totalorder %s59, %s60
      %p71 = scmp.eq.s32.totalorder %s25, 0
      %p72 = por %p70, %p71
      %p73 = scmp.ne.s32.totalorder %s59, %s60
      %p74 = scmp.eq.s32.totalorder %s26, 1
      %p75 = por %p73, %p74
      %p77 = scmp.ne.s32.totalorder %s60, %s76
      %p78 = scmp.eq.s32.totalorder %s26, 0
      %p79 = por %p77, %p78
      %s81 = sadd.s32 %s80, 1
      %p84 = scmp.eq.s32.totalorder %s20, 1
      %p85 = scmp.ne.s32.totalorder %s80, %s82
      %p86 = scmp.eq.s32.totalorder %s20, 0
      %p87 = por %p85, %p86
      %p88 = scmp.ne.s32.totalorder %s80, %s82
      %p89 = scmp.eq.s32.totalorder %s25, 1
      %p90 = por %p88, %p89
      %p91 = scmp.ne.s32.totalorder %s82, %s83
      %p92 = scmp.eq.s32.totalorder %s25, 0
      %p93 = por %p91, %p92
      %p94 = scmp.ne.s32.totalorder %s82, %s83
      %p95 = scmp.eq.s32.totalorder %s26, 1
      %p96 = por %p94, %p95
      %p98 = scmp.ne.s32.totalorder %s83, %s97
      %p99 = scmp.eq.s32.totalorder %s26, 0
      %p100 = por %p98, %p99
      %s102 = sadd.s32 %s101, 1
      %p105 = scmp.eq.s32.totalorder %s20, 1
      %p106 = scmp.ne.s32.totalorder %s101, %s103
      %p107 = scmp.eq.s32.totalorder %s20, 0
      %p108 = por %p106, %p107
      %p109 = scmp.ne.s32.totalorder %s101, %s103
      %p110 = scmp.eq.s32.totalorder %s25, 1
      %p111 = por %p109, %p110
      %p112 = scmp.ne.s32.totalorder %s103, %s104
      %p113 = scmp.eq.s32.totalorder %s25, 0
      %p114 = por %p112, %p113
      %p115 = scmp.ne.s32.totalorder %s103, %s104
      %p116 = scmp.eq.s32.totalorder %s26, 1
      %p117 = por %p115, %p116
      %p119 = scmp.ne.s32.totalorder %s104, %s118
      %p120 = scmp.eq.s32.totalorder %s26, 0
      %p121 = por %p119, %p120
      %s123 = sadd.s32 %s122, 1
      %p126 = scmp.eq.s32.totalorder %s20, 1
      %p127 = scmp.ne.s32.totalorder %s122, %s124
      %p128 = scmp.eq.s32.totalorder %s20, 0
      %p129 = por %p127, %p128
      %p130 = scmp.ne.s32.totalorder %s122, %s124
      %p131 = scmp.eq.s32.totalorder %s25, 1
      %p132 = por %p130, %p131
      %p133 = scmp.ne.s32.totalorder %s124, %s125
      %p134 = scmp.eq.s32.totalorder %s25, 0
      %p135 = por %p133, %p134
      %p136 = scmp.ne.s32.totalorder %s124, %s125
      %p137 = scmp.eq.s32.totalorder %s26, 1
      %p138 = por %p136, %p137
      %p140 = scmp.ne.s32.totalorder %s125, %s139
      %p141 = scmp.eq.s32.totalorder %s26, 0
      %p142 = por %p140, %p141
      %s144 = sadd.s32 %s143, 1
      %p147 = scmp.eq.s32.totalorder %s20, 1
      %p148 = scmp.ne.s32.totalorder %s143, %s145
      %p149 = scmp.eq.s32.totalorder %s20, 0
      %p150 = por %p148, %p149
      %p151 = scmp.ne.s32.totalorder %s143, %s145
      %p152 = scmp.eq.s32.totalorder %s25, 1
      %p153 = por %p151, %p152
      %p154 = scmp.ne.s32.totalorder %s145, %s146
      %p155 = scmp.eq.s32.totalorder %s25, 0
      %p156 = por %p154, %p155
      %p157 = scmp.ne.s32.totalorder %s145, %s146
      %p158 = scmp.eq.s32.totalorder %s26, 1
      %p159 = por %p157, %p158
      %p161 = scmp.ne.s32.totalorder %s146, %s160
      %p162 = scmp.eq.s32.totalorder %s26, 0
      %p163 = por %p161, %p162
      %s165 = sadd.s32 %s164, 1
      %p168 = scmp.eq.s32.totalorder %s20, 1
      %p169 = scmp.ne.s32.totalorder %s164, %s166
      %p170 = scmp.eq.s32.totalorder %s20, 0
      %p171 = por %p169, %p170
      %p172 = scmp.ne.s32.totalorder %s164, %s166
      %p173 = scmp.eq.s32.totalorder %s25, 1
      %p174 = por %p172, %p173
      %p175 = scmp.ne.s32.totalorder %s166, %s167
      %p176 = scmp.eq.s32.totalorder %s25, 0
      %p177 = por %p175, %p176
      %p178 = scmp.ne.s32.totalorder %s166, %s167
      %p179 = scmp.eq.s32.totalorder %s26, 1
      %p180 = por %p178, %p179
      %p182 = scmp.ne.s32.totalorder %s167, %s181
      %p183 = scmp.eq.s32.totalorder %s26, 0
      %p184 = por %p182, %p183
      %s186 = sadd.s32 %s185, 1
      %p189 = scmp.eq.s32.totalorder %s20, 1
      %p190 = scmp.ne.s32.totalorder %s185, %s187
      %p191 = scmp.eq.s32.totalorder %s20, 0
      %p192 = por %p190, %p191
      %p193 = scmp.ne.s32.totalorder %s185, %s187
      %p194 = scmp.eq.s32.totalorder %s25, 1
      %p195 = por %p193, %p194
      %p196 = scmp.ne.s32.totalorder %s187, %s188
      %p197 = scmp.eq.s32.totalorder %s25, 0
      %p198 = por %p196, %p197
      %p199 = scmp.ne.s32.totalorder %s187, %s188
      %p200 = scmp.eq.s32.totalorder %s26, 1
      %p201 = por %p199, %p200
      %p203 = scmp.ne.s32.totalorder %s188, %s202
      %p204 = scmp.eq.s32.totalorder %s26, 0
      %p205 = por %p203, %p204
      %s207 = sadd.s32 %s206, 1
      %p210 = scmp.eq.s32.totalorder %s20, 1
      %p211 = scmp.ne.s32.totalorder %s206, %s208
      %p212 = scmp.eq.s32.totalorder %s20, 0
      %p213 = por %p211, %p212
      %p214 = scmp.ne.s32.totalorder %s206, %s208
      %p215 = scmp.eq.s32.totalorder %s25, 1
      %p216 = por %p214, %p215
      %p217 = scmp.ne.s32.totalorder %s208, %s209
      %p218 = scmp.eq.s32.totalorder %s25, 0
      %p219 = por %p217, %p218
      %p220 = scmp.ne.s32.totalorder %s208, %s209
      %p221 = scmp.eq.s32.totalorder %s26, 1
      %p222 = por %p220, %p221
      %p224 = scmp.ne.s32.totalorder %s209, %s223
      %p225 = scmp.eq.s32.totalorder %s26, 0
      %p226 = por %p224, %p225
      %s228 = sadd.s32 %s227, 1
      %p231 = scmp.eq.s32.totalorder %s20, 1
      %p232 = scmp.ne.s32.totalorder %s227, %s229
      %p233 = scmp.eq.s32.totalorder %s20, 0
      %p234 = por %p232, %p233
      %p235 = scmp.ne.s32.totalorder %s227, %s229
      %p236 = scmp.eq.s32.totalorder %s25, 1
      %p237 = por %p235, %p236
      %p238 = scmp.ne.s32.totalorder %s229, %s230
      %p239 = scmp.eq.s32.totalorder %s25, 0
      %p240 = por %p238, %p239
      %p241 = scmp.ne.s32.totalorder %s229, %s230
      %p242 = scmp.eq.s32.totalorder %s26, 1
      %p243 = por %p241, %p242
      %p245 = scmp.ne.s32.totalorder %s230, %s244
      %p246 = scmp.eq.s32.totalorder %s26, 0
      %p247 = por %p245, %p246
      %s249 = sadd.s32 %s248, 1
      %p252 = scmp.eq.s32.totalorder %s20, 1
      %p253 = scmp.ne.s32.totalorder %s248, %s250
      %p254 = scmp.eq.s32.totalorder %s20, 0
      %p255 = por %p253, %p254
      %p256 = scmp.ne.s32.totalorder %s248, %s250
      %p257 = scmp.eq.s32.totalorder %s25, 1
      %p258 = por %p256, %p257
      %p259 = scmp.ne.s32.totalorder %s250, %s251
      %p260 = scmp.eq.s32.totalorder %s25, 0
      %p261 = por %p259, %p260
      %p262 = scmp.ne.s32.totalorder %s250, %s251
      %p263 = scmp.eq.s32.totalorder %s26, 1
      %p264 = por %p262, %p263
      %p266 = scmp.ne.s32.totalorder %s251, %s265
      %p267 = scmp.eq.s32.totalorder %s26, 0
      %p268 = por %p266, %p267
      %s269 = ssub.s32 %s20, %s27
      %p270 = scmp.eq.s32.totalorder %s269, 0
      %s272 = sadd.s32 %s271, 1
      %s273 = scalar_select %p270, %s271, %s272
      %p276 = pneg %p270
      %p277 = scmp.eq.s32.totalorder %s20, 1
      %p278 = por %p276, %p277
      %p279 = scmp.ne.s32.totalorder %s271, %s274
      %p280 = scmp.eq.s32.totalorder %s20, 0
      %p281 = por %p279, %p280
      %p282 = scmp.ne.s32.totalorder %s271, %s274
      %p283 = scmp.eq.s32.totalorder %s25, 1
      %p284 = por %p282, %p283
      %p285 = scmp.ne.s32.totalorder %s274, %s275
      %p286 = scmp.eq.s32.totalorder %s25, 0
      %p287 = por %p285, %p286
      %p288 = scmp.ne.s32.totalorder %s274, %s275
      %p289 = scmp.eq.s32.totalorder %s26, 1
      %p290 = por %p288, %p289
      %p292 = scmp.ne.s32.totalorder %s275, %s291
      %p293 = scmp.eq.s32.totalorder %s26, 0
      %p294 = por %p292, %p293
      %p295 = scmp.le.s32.totalorder 1, %s20
      %p296 = scmp.lt.s32.totalorder %s20, 3
      %p297 = pnand %p295, %p296
      %p298 = pneg %p297
      // Predicated region
      $region9: #{tpu_custom_call.1} parent=5 // pred_check
        _
      $region10: #{tpu_custom_call.1} parent=5 // pred_check_branch
        %300 = sbr.rel (%p297) target = $region12
      $region11: #{tpu_custom_call.1} parent=5 // pred_region
        %s301 = ssub.s32 %s20, 1
        // Predicated region
        $region13: #{tpu_custom_call.1} parent=11 // pred_check
          %p302 = pneg %p93
        $region14: #{tpu_custom_call.1} parent=11 // pred_check_branch
          %304 = sbr.rel (%p302) target = $region16
        $region15: #{tpu_custom_call.1} parent=11 // pred_region
          _
        $region16: #{tpu_custom_call.1} parent=11 // pred_fallthru
          _
        // Predicated region
        $region17: #{tpu_custom_call.1} parent=11 // pred_check
          %p305 = pneg %p114
        $region18: #{tpu_custom_call.1} parent=11 // pred_check_branch
          %307 = sbr.rel (%p305) target = $region20
        $region19: #{tpu_custom_call.1} parent=11 // pred_region
          _
        $region20: #{tpu_custom_call.1} parent=11 // pred_fallthru
          _
        // Predicated region
        $region21: #{tpu_custom_call.1} parent=11 // pred_check
          %p308 = pneg %p135
        $region22: #{tpu_custom_call.1} parent=11 // pred_check_branch
          %310 = sbr.rel (%p308) target = $region24
        $region23: #{tpu_custom_call.1} parent=11 // pred_region
          _
        $region24: #{tpu_custom_call.1} parent=11 // pred_fallthru
          _
        // Predicated region
        $region25: #{tpu_custom_call.1} parent=11 // pred_check
          %p311 = pneg %p156
        $region26: #{tpu_custom_call.1} parent=11 // pred_check_branch
          %313 = sbr.rel (%p311) target = $region28
        $region27: #{tpu_custom_call.1} parent=11 // pred_region
          _
        $region28: #{tpu_custom_call.1} parent=11 // pred_fallthru
          _
        // Predicated region
        $region29: #{tpu_custom_call.1} parent=11 // pred_check
          %p314 = pneg %p177
        $region30: #{tpu_custom_call.1} parent=11 // pred_check_branch
          %316 = sbr.rel (%p314) target = $region32
        $region31: #{tpu_custom_call.1} parent=11 // pred_region
          _
        $region32: #{tpu_custom_call.1} parent=11 // pred_fallthru
          _
        // Predicated region
        $region33: #{tpu_custom_call.1} parent=11 // pred_check
          %p317 = pneg %p198
        $region34: #{tpu_custom_call.1} parent=11 // pred_check_branch
          %319 = sbr.rel (%p317) target = $region36
        $region35: #{tpu_custom_call.1} parent=11 // pred_region
          _
        $region36: #{tpu_custom_call.1} parent=11 // pred_fallthru
          _
        // Predicated region
        $region37: #{tpu_custom_call.1} parent=11 // pred_check
          %p320 = pneg %p219
        $region38: #{tpu_custom_call.1} parent=11 // pred_check_branch
          %322 = sbr.rel (%p320) target = $region40
        $region39: #{tpu_custom_call.1} parent=11 // pred_region
          _
        $region40: #{tpu_custom_call.1} parent=11 // pred_fallthru
          _
        // Predicated region
        $region41: #{tpu_custom_call.1} parent=11 // pred_check
          %p323 = pneg %p240
        $region42: #{tpu_custom_call.1} parent=11 // pred_check_branch
          %325 = sbr.rel (%p323) target = $region44
        $region43: #{tpu_custom_call.1} parent=11 // pred_region
          _
        $region44: #{tpu_custom_call.1} parent=11 // pred_fallthru
          _
        // Predicated region
        $region45: #{tpu_custom_call.1} parent=11 // pred_check
          %p326 = pneg %p261
        $region46: #{tpu_custom_call.1} parent=11 // pred_check_branch
          %328 = sbr.rel (%p326) target = $region48
        $region47: #{tpu_custom_call.1} parent=11 // pred_region
          _
        $region48: #{tpu_custom_call.1} parent=11 // pred_fallthru
          _
      $region12: #{tpu_custom_call.1} parent=5 // pred_fallthru
        _
      %p329 = scmp.lt.s32.totalorder %s20, 2
      // Predicated region
      $region49: #{tpu_custom_call.1} parent=5 // pred_check
        %p330 = pneg %p329
      $region50: #{tpu_custom_call.1} parent=5 // pred_check_branch
        %332 = sbr.rel (%p330) target = $region52
      $region51: #{tpu_custom_call.1} parent=5 // pred_region
        // Predicated region
        $region53: #{tpu_custom_call.1} parent=51 // pred_check
          %p333 = pneg %p40
        $region54: #{tpu_custom_call.1} parent=51 // pred_check_branch
          %335 = sbr.rel (%p333) target = $region56
        $region55: #{tpu_custom_call.1} parent=51 // pred_region
          %s336 = smul.u32 16, %s20
          %p337 = scmp.lt.s32.totalorder %s336, 31
          %s338 = scalar_select %p337, %s336, 31
          %s339 = smul.addr %s338, 8
          %s340 = scalar_lea.vmem %s0, %s339
          %s341 = smul.u32 16, %s20
        $region56: #{tpu_custom_call.1} parent=51 // pred_fallthru
          _
        // Predicated region
        $region57: #{tpu_custom_call.1} parent=51 // pred_check
          %p342 = pneg %p66
        $region58: #{tpu_custom_call.1} parent=51 // pred_check_branch
          %344 = sbr.rel (%p342) target = $region60
        $region59: #{tpu_custom_call.1} parent=51 // pred_region
          %s345 = smul.u32 16, %s20
          %p346 = scmp.lt.s32.totalorder %s345, 31
          %s347 = scalar_select %p346, %s345, 31
          %s348 = smul.addr %s347, 8
          %s349 = scalar_lea.vmem %s1, %s348
          %s350 = smul.u32 16, %s20
        $region60: #{tpu_custom_call.1} parent=51 // pred_fallthru
          _
      $region52: #{tpu_custom_call.1} parent=5 // pred_fallthru
        _
      %p351 = scmp.le.s32.totalorder 1, %s20
      %p352 = scmp.lt.s32.totalorder %s20, 3
      %p353 = pnand %p351, %p352
      %p354 = pneg %p353
      // Predicated region
      $region61: #{tpu_custom_call.1} parent=5 // pred_check
        _
      $region62: #{tpu_custom_call.1} parent=5 // pred_check_branch
        %356 = sbr.rel (%p353) target = $region64
      $region63: #{tpu_custom_call.1} parent=5 // pred_region
        %s357 = ssub.s32 %s20, 1
        %s358 = smul.u32 16, %s25
        %p359 = scmp.lt.s32.totalorder %s358, 31
        %s360 = scalar_select %p359, %s358, 31
        %s361 = smul.addr %s360, 8
        %s362 = scalar_lea.vmem %s0, %s361
        %p363 = pneg %p46
        %p364 = pneg %p43
        %s365 = smul.u32 16, %s25
        %p366 = scmp.lt.s32.totalorder %s365, 31
        %s367 = scalar_select %p366, %s365, 31
        %s368 = smul.addr %s367, 8
        %s369 = scalar_lea.vmem %s1, %s368
        %p370 = pneg %p72
        %p371 = pneg %p69
        %p372 = pneg %p93
        %p373 = pneg %p90
        %p374 = pneg %p114
        %p375 = pneg %p111
        %p376 = pneg %p135
        %p377 = pneg %p132
        %p378 = pneg %p156
        %p379 = pneg %p153
        %p380 = pneg %p177
        %p381 = pneg %p174
        %p382 = pneg %p198
        %p383 = pneg %p195
        %p384 = pneg %p219
        %p385 = pneg %p216
        %p386 = pneg %p240
        %p387 = pneg %p237
        %p388 = pneg %p261
        %p389 = pneg %p258
        %p390 = pneg %p287
        %p391 = pneg %p284
        %s392 = sand.u32 %s274, 1
        %s393 = scalar_lea.sflag [#allocation3], %s392
        %s394 = sand.u32 %s274, 1
        %s395 = smul.addr %s394, 8
        %s396 = scalar_lea.vmem [#allocation2], %s395
        %s397 = smul.u32 16, %s25
        %p398 = scmp.lt.s32.totalorder %s397, 31
        %s399 = scalar_select %p398, %s397, 31
        %s400 = smul.addr %s399, 8
        %s401 = scalar_lea.vmem %s0, %s400
        %s402 = smul.u32 16, %s25
        %s403 = smul.u32 16, %s25
        %p404 = scmp.lt.s32.totalorder %s403, 31
        %s405 = scalar_select %p404, %s403, 31
        %s406 = smul.addr %s405, 8
        %s407 = scalar_lea.vmem %s1, %s406
        %s408 = smul.u32 16, %s25
        %v409 = vld [vmem:[%s401] sm:$0xff]
        %v410 = vld [vmem:[%s401 + $0x8] sm:$0xff]
        %v411 = vld [vmem:[%s401 + $0x10] sm:$0xff]
        %v412 = vld [vmem:[%s401 + $0x18] sm:$0xff]
        %v413 = vld [vmem:[%s401 + $0x20] sm:$0xff]
        %v414 = vld [vmem:[%s401 + $0x28] sm:$0xff]
        %v415 = vld [vmem:[%s401 + $0x30] sm:$0xff]
        %v416 = vld [vmem:[%s401 + $0x38] sm:$0xff]
        %v417 = vld [vmem:[%s401 + $0x40] sm:$0xff]
        %v418 = vld [vmem:[%s401 + $0x48] sm:$0xff]
        %v419 = vld [vmem:[%s401 + $0x50] sm:$0xff]
        %v420 = vld [vmem:[%s401 + $0x58] sm:$0xff]
        %v421 = vld [vmem:[%s401 + $0x60] sm:$0xff]
        %v422 = vld [vmem:[%s401 + $0x68] sm:$0xff]
        %v423 = vld [vmem:[%s401 + $0x70] sm:$0xff]
        %v424 = vld [vmem:[%s401 + $0x78] sm:$0xff]
        %v425 = vld [vmem:[%s2] sm:$0xff]
        %v426 = vld [vmem:[%s2 + $0x8] sm:$0xff]
        %vm427 = vcmask 130048
        %v429 = vsel %vm427, %v409, 0
        %v432 = vsel %vm427, %v410, 0
        %v435 = vsel %vm427, %v411, 0
        %v438 = vsel %vm427, %v412, 0
        %v441 = vsel %vm427, %v413, 0
        %v444 = vsel %vm427, %v414, 0
        %v447 = vsel %vm427, %v415, 0
        %v450 = vsel %vm427, %v416, 0
        %v453 = vsel %vm427, %v417, 0
        %v456 = vsel %vm427, %v418, 0
        %v459 = vsel %vm427, %v419, 0
        %v462 = vsel %vm427, %v420, 0
        %v465 = vsel %vm427, %v421, 0
        %v468 = vsel %vm427, %v422, 0
        %v471 = vsel %vm427, %v423, 0
        %v474 = vsel %vm427, %v424, 0
        %476 = vmatprep.subr.mxu0 0.0
        %477 = vmatpush1.msra.mxu0 %v425
        %478 = vmatprep.subr.mxu0 0.0
        %479 = vmatpush1.msra.mxu0 %v426
        %480 = vmatprep.subr.mxu0 0.0
        %481 = vmatpush1.msra.mxu0 0.0
        %482 = vmatprep.subr.mxu0 0.0
        %483 = vmatpush1.msra.mxu0 0.0
        %484 = vmatprep.subr.mxu0 0.0
        %485 = vmatpush1.msra.mxu0 0.0
        %486 = vmatprep.subr.mxu0 0.0
        %487 = vmatpush1.msra.mxu0 0.0
        %488 = vmatprep.subr.mxu0 0.0
        %489 = vmatpush1.msra.mxu0 0.0
        %490 = vmatprep.subr.mxu0 0.0
        %491 = vmatpush1.msra.mxu0 0.0
        %492 = vmatprep.subr.mxu0 0.0
        %493 = vmatpush1.msra.mxu0 0.0
        %494 = vmatprep.subr.mxu0 0.0
        %495 = vmatpush1.msra.mxu0 0.0
        %496 = vmatprep.subr.mxu0 0.0
        %497 = vmatpush1.msra.mxu0 0.0
        %498 = vmatprep.subr.mxu0 0.0
        %499 = vmatpush1.msra.mxu0 0.0
        %500 = vmatprep.subr.mxu0 0.0
        %501 = vmatpush1.msra.mxu0 0.0
        %502 = vmatprep.subr.mxu0 0.0
        %503 = vmatpush1.msra.mxu0 0.0
        %504 = vmatprep.subr.mxu0 0.0
        %505 = vmatpush1.msra.mxu0 0.0
        %506 = vmatprep.subr.mxu0 0.0
        %507 = vmatpush1.msra.mxu0 0.0
        %508 = vmatprep.subr.mxu0 0.0
        %509 = vmatpush1.msra.mxu0 0.0
        %510 = vmatprep.subr.mxu0 0.0
        %511 = vmatpush1.msra.mxu0 0.0
        %512 = vmatprep.subr.mxu0 0.0
        %513 = vmatpush1.msra.mxu0 0.0
        %514 = vmatprep.subr.mxu0 0.0
        %515 = vmatpush1.msra.mxu0 0.0
        %516 = vmatprep.subr.mxu0 0.0
        %517 = vmatpush1.msra.mxu0 0.0
        %518 = vmatprep.subr.mxu0 0.0
        %519 = vmatpush1.msra.mxu0 0.0
        %520 = vmatprep.subr.mxu0 0.0
        %521 = vmatpush1.msra.mxu0 0.0
        %522 = vmatprep.subr.mxu0 0.0
        %523 = vmatpush1.msra.mxu0 0.0
        %524 = vmatprep.subr.mxu0 0.0
        %525 = vmatpush1.msra.mxu0 0.0
        %526 = vmatprep.subr.mxu0 0.0
        %527 = vmatpush1.msra.mxu0 0.0
        %528 = vmatprep.subr.mxu0 0.0
        %529 = vmatpush1.msra.mxu0 0.0
        %530 = vmatprep.subr.mxu0 0.0
        %531 = vmatpush1.msra.mxu0 0.0
        %532 = vmatprep.subr.mxu0 0.0
        %533 = vmatpush1.msra.mxu0 0.0
        %534 = vmatprep.subr.mxu0 0.0
        %535 = vmatpush1.msra.mxu0 0.0
        %536 = vmatprep.subr.mxu0 0.0
        %537 = vmatpush1.msra.mxu0 0.0
        %538 = vmatprep.subr.mxu0 0.0
        %539 = vmatpush1.msra.mxu0 0.0
        %540 = vmatprep.mubr.f32.mxu0 0.0
        %541 = vmatmul.mubr.f32.gmra.mrb[0].mxu0 %v429
        %v542 = vpop.f32.mrb[0].mxu0
        %v543 = vadd.f32 0.0, %v542
        %v544 = vpop.f32.mrb[0].mxu0
        %545 = vmatprep.mubr.f32.mxu0 0.0
        %546 = vmatmul.mubr.f32.gmra.mrb[0].mxu0 %v432
        %v547 = vpop.f32.mrb[0].mxu0
        %v548 = vadd.f32 0.0, %v547
        %v549 = vpop.f32.mrb[0].mxu0
        %550 = vmatprep.mubr.f32.mxu0 0.0
        %551 = vmatmul.mubr.f32.gmra.mrb[0].mxu0 %v435
        %v552 = vpop.f32.mrb[0].mxu0
        %v553 = vadd.f32 0.0, %v552
        %v554 = vpop.f32.mrb[0].mxu0
        %555 = vmatprep.mubr.f32.mxu0 0.0
        %556 = vmatmul.mubr.f32.gmra.mrb[0].mxu0 %v438
        %v557 = vpop.f32.mrb[0].mxu0
        %v558 = vadd.f32 0.0, %v557
        %v559 = vpop.f32.mrb[0].mxu0
        %560 = vmatprep.mubr.f32.mxu0 0.0
        %561 = vmatmul.mubr.f32.gmra.mrb[0].mxu0 %v441
        %v562 = vpop.f32.mrb[0].mxu0
        %v563 = vadd.f32 0.0, %v562
        %v564 = vpop.f32.mrb[0].mxu0
        %565 = vmatprep.mubr.f32.mxu0 0.0
        %566 = vmatmul.mubr.f32.gmra.mrb[0].mxu0 %v444
        %v567 = vpop.f32.mrb[0].mxu0
        %v568 = vadd.f32 0.0, %v567
        %v569 = vpop.f32.mrb[0].mxu0
        %570 = vmatprep.mubr.f32.mxu0 0.0
        %571 = vmatmul.mubr.f32.gmra.mrb[0].mxu0 %v447
        %v572 = vpop.f32.mrb[0].mxu0
        %v573 = vadd.f32 0.0, %v572
        %v574 = vpop.f32.mrb[0].mxu0
        %575 = vmatprep.mubr.f32.mxu0 0.0
        %576 = vmatmul.mubr.f32.gmra.mrb[0].mxu0 %v450
        %v577 = vpop.f32.mrb[0].mxu0
        %v578 = vadd.f32 0.0, %v577
        %v579 = vpop.f32.mrb[0].mxu0
        %580 = vmatprep.mubr.f32.mxu0 0.0
        %581 = vmatmul.mubr.f32.gmra.mrb[0].mxu0 %v453
        %v582 = vpop.f32.mrb[0].mxu0
        %v583 = vadd.f32 0.0, %v582
        %v584 = vpop.f32.mrb[0].mxu0
        %585 = vmatprep.mubr.f32.mxu0 0.0
        %586 = vmatmul.mubr.f32.gmra.mrb[0].mxu0 %v456
        %v587 = vpop.f32.mrb[0].mxu0
        %v588 = vadd.f32 0.0, %v587
        %v589 = vpop.f32.mrb[0].mxu0
        %590 = vmatprep.mubr.f32.mxu0 0.0
        %591 = vmatmul.mubr.f32.gmra.mrb[0].mxu0 %v459
        %v592 = vpop.f32.mrb[0].mxu0
        %v593 = vadd.f32 0.0, %v592
        %v594 = vpop.f32.mrb[0].mxu0
        %595 = vmatprep.mubr.f32.mxu0 0.0
        %596 = vmatmul.mubr.f32.gmra.mrb[0].mxu0 %v462
        %v597 = vpop.f32.mrb[0].mxu0
        %v598 = vadd.f32 0.0, %v597
        %v599 = vpop.f32.mrb[0].mxu0
        %600 = vmatprep.mubr.f32.mxu0 0.0
        %601 = vmatmul.mubr.f32.gmra.mrb[0].mxu0 %v465
        %v602 = vpop.f32.mrb[0].mxu0
        %v603 = vadd.f32 0.0, %v602
        %v604 = vpop.f32.mrb[0].mxu0
        %605 = vmatprep.mubr.f32.mxu0 0.0
        %606 = vmatmul.mubr.f32.gmra.mrb[0].mxu0 %v468
        %v607 = vpop.f32.mrb[0].mxu0
        %v608 = vadd.f32 0.0, %v607
        %v609 = vpop.f32.mrb[0].mxu0
        %610 = vmatprep.mubr.f32.mxu0 0.0
        %611 = vmatmul.mubr.f32.gmra.mrb[0].mxu0 %v471
        %v612 = vpop.f32.mrb[0].mxu0
        %v613 = vadd.f32 0.0, %v612
        %v614 = vpop.f32.mrb[0].mxu0
        %615 = vmatprep.mubr.f32.mxu0 0.0
        %616 = vmatmul.mubr.f32.gmra.mrb[0].mxu0 %v474
        %v617 = vpop.f32.mrb[0].mxu0
        %v618 = vadd.f32 0.0, %v617
        %v619 = vpop.f32.mrb[0].mxu0
        %620 = vdwg.mxu0
        %v621 = vld [vmem:[%s3] sm:$0xff]
        %v622 = vld [vmem:[%s3 + $0x8] sm:$0xff]
        %v623 = vld [vmem:[%s3 + $0x10] sm:$0xff]
        %v624 = vld [vmem:[%s3 + $0x18] sm:$0xff]
        %v625 = vld [vmem:[%s3 + $0x20] sm:$0xff]
        %v626 = vld [vmem:[%s3 + $0x28] sm:$0xff]
        %v627 = vld [vmem:[%s3 + $0x30] sm:$0xff]
        %v628 = vld [vmem:[%s3 + $0x38] sm:$0xff]
        %v629 = vld [vmem:[%s3 + $0x40] sm:$0xff]
        %v630 = vld [vmem:[%s3 + $0x48] sm:$0xff]
        %v631 = vld [vmem:[%s3 + $0x50] sm:$0xff]
        %v632 = vld [vmem:[%s3 + $0x58] sm:$0xff]
        %v633 = vld [vmem:[%s3 + $0x60] sm:$0xff]
        %v634 = vld [vmem:[%s3 + $0x68] sm:$0xff]
        %v635 = vld [vmem:[%s3 + $0x70] sm:$0xff]
        %v636 = vld [vmem:[%s3 + $0x78] sm:$0xff]
        %v637 = vmul.f32 %v543, %v621
        %v638 = vmul.f32 %v548, %v622
        %v639 = vmul.f32 %v553, %v623
        %v640 = vmul.f32 %v558, %v624
        %v641 = vmul.f32 %v563, %v625
        %v642 = vmul.f32 %v568, %v626
        %v643 = vmul.f32 %v573, %v627
        %v644 = vmul.f32 %v578, %v628
        %v645 = vmul.f32 %v583, %v629
        %v646 = vmul.f32 %v588, %v630
        %v647 = vmul.f32 %v593, %v631
        %v648 = vmul.f32 %v598, %v632
        %v649 = vmul.f32 %v603, %v633
        %v650 = vmul.f32 %v608, %v634
        %v651 = vmul.f32 %v613, %v635
        %v652 = vmul.f32 %v618, %v636
        %v653 = vld [vmem:[%s407] sm:$0xff]
        %v654 = vld [vmem:[%s407 + $0x8] sm:$0xff]
        %v655 = vld [vmem:[%s407 + $0x10] sm:$0xff]
        %v656 = vld [vmem:[%s407 + $0x18] sm:$0xff]
        %v657 = vld [vmem:[%s407 + $0x20] sm:$0xff]
        %v658 = vld [vmem:[%s407 + $0x28] sm:$0xff]
        %v659 = vld [vmem:[%s407 + $0x30] sm:$0xff]
        %v660 = vld [vmem:[%s407 + $0x38] sm:$0xff]
        %v661 = vld [vmem:[%s407 + $0x40] sm:$0xff]
        %v662 = vld [vmem:[%s407 + $0x48] sm:$0xff]
        %v663 = vld [vmem:[%s407 + $0x50] sm:$0xff]
        %v664 = vld [vmem:[%s407 + $0x58] sm:$0xff]
        %v665 = vld [vmem:[%s407 + $0x60] sm:$0xff]
        %v666 = vld [vmem:[%s407 + $0x68] sm:$0xff]
        %v667 = vld [vmem:[%s407 + $0x70] sm:$0xff]
        %v668 = vld [vmem:[%s407 + $0x78] sm:$0xff]
        %669 = vmatprep.subr.mxu0 0.0
        %670 = vmatpush1.msra.mxu0 %v653
        %671 = vmatprep.subr.mxu0 0.0
        %672 = vmatpush1.msra.mxu0 %v654
        %673 = vmatprep.subr.mxu0 0.0
        %674 = vmatpush1.msra.mxu0 %v655
        %675 = vmatprep.subr.mxu0 0.0
        %676 = vmatpush1.msra.mxu0 %v656
        %677 = vmatprep.subr.mxu0 0.0
        %678 = vmatpush1.msra.mxu0 %v657
        %679 = vmatprep.subr.mxu0 0.0
        %680 = vmatpush1.msra.mxu0 %v658
        %681 = vmatprep.subr.mxu0 0.0
        %682 = vmatpush1.msra.mxu0 %v659
        %683 = vmatprep.subr.mxu0 0.0
        %684 = vmatpush1.msra.mxu0 %v660
        %685 = vmatprep.subr.mxu0 0.0
        %686 = vmatpush1.msra.mxu0 %v661
        %687 = vmatprep.subr.mxu0 0.0
        %688 = vmatpush1.msra.mxu0 %v662
        %689 = vmatprep.subr.mxu0 0.0
        %690 = vmatpush1.msra.mxu0 %v663
        %691 = vmatprep.subr.mxu0 0.0
        %692 = vmatpush1.msra.mxu0 %v664
        %693 = vmatprep.subr.mxu0 0.0
        %694 = vmatpush1.msra.mxu0 %v665
        %695 = vmatprep.subr.mxu0 0.0
        %696 = vmatpush1.msra.mxu0 %v666
        %697 = vmatprep.subr.mxu0 0.0
        %698 = vmatpush1.msra.mxu0 %v667
        %699 = vmatprep.subr.mxu0 0.0
        %700 = vmatpush1.msra.mxu0 %v668
        %701 = vmatprep.subr.mxu0 0.0
        %702 = vmatpush1.msra.mxu0 0.0
        %703 = vmatprep.subr.mxu0 0.0
        %704 = vmatpush1.msra.mxu0 0.0
        %705 = vmatprep.subr.mxu0 0.0
        %706 = vmatpush1.msra.mxu0 0.0
        %707 = vmatprep.subr.mxu0 0.0
        %708 = vmatpush1.msra.mxu0 0.0
        %709 = vmatprep.subr.mxu0 0.0
        %710 = vmatpush1.msra.mxu0 0.0
        %711 = vmatprep.subr.mxu0 0.0
        %712 = vmatpush1.msra.mxu0 0.0
        %713 = vmatprep.subr.mxu0 0.0
        %714 = vmatpush1.msra.mxu0 0.0
        %715 = vmatprep.subr.mxu0 0.0
        %716 = vmatpush1.msra.mxu0 0.0
        %717 = vmatprep.subr.mxu0 0.0
        %718 = vmatpush1.msra.mxu0 0.0
        %719 = vmatprep.subr.mxu0 0.0
        %720 = vmatpush1.msra.mxu0 0.0
        %721 = vmatprep.subr.mxu0 0.0
        %722 = vmatpush1.msra.mxu0 0.0
        %723 = vmatprep.subr.mxu0 0.0
        %724 = vmatpush1.msra.mxu0 0.0
        %725 = vmatprep.subr.mxu0 0.0
        %726 = vmatpush1.msra.mxu0 0.0
        %727 = vmatprep.subr.mxu0 0.0
        %728 = vmatpush1.msra.mxu0 0.0
        %729 = vmatprep.subr.mxu0 0.0
        %730 = vmatpush1.msra.mxu0 0.0
        %731 = vmatprep.subr.mxu0 0.0
        %732 = vmatpush1.msra.mxu0 0.0
        %733 = vmatprep.mubr.f32.mxu0 0.0
        %734 = vmatmul.mubr.f32.gmra.mrb[0].mxu0 %v637
        %v735 = vpop.f32.mrb[0].mxu0
        %v736 = vadd.f32 0.0, %v735
        %v737 = vpop.f32.mrb[0].mxu0
        %738 = vmatprep.mubr.f32.mxu0 0.0
        %739 = vmatmul.mubr.f32.gmra.mrb[0].mxu0 %v638
        %v740 = vpop.f32.mrb[0].mxu0
        %v741 = vadd.f32 0.0, %v740
        %v742 = vpop.f32.mrb[0].mxu0
        %743 = vmatprep.mubr.f32.mxu0 0.0
        %744 = vmatmul.mubr.f32.gmra.mrb[0].mxu0 %v639
        %v745 = vpop.f32.mrb[0].mxu0
        %v746 = vadd.f32 0.0, %v745
        %v747 = vpop.f32.mrb[0].mxu0
        %748 = vmatprep.mubr.f32.mxu0 0.0
        %749 = vmatmul.mubr.f32.gmra.mrb[0].mxu0 %v640
        %v750 = vpop.f32.mrb[0].mxu0
        %v751 = vadd.f32 0.0, %v750
        %v752 = vpop.f32.mrb[0].mxu0
        %753 = vmatprep.mubr.f32.mxu0 0.0
        %754 = vmatmul.mubr.f32.gmra.mrb[0].mxu0 %v641
        %v755 = vpop.f32.mrb[0].mxu0
        %v756 = vadd.f32 0.0, %v755
        %v757 = vpop.f32.mrb[0].mxu0
        %758 = vmatprep.mubr.f32.mxu0 0.0
        %759 = vmatmul.mubr.f32.gmra.mrb[0].mxu0 %v642
        %v760 = vpop.f32.mrb[0].mxu0
        %v761 = vadd.f32 0.0, %v760
        %v762 = vpop.f32.mrb[0].mxu0
        %763 = vmatprep.mubr.f32.mxu0 0.0
        %764 = vmatmul.mubr.f32.gmra.mrb[0].mxu0 %v643
        %v765 = vpop.f32.mrb[0].mxu0
        %v766 = vadd.f32 0.0, %v765
        %v767 = vpop.f32.mrb[0].mxu0
        %768 = vmatprep.mubr.f32.mxu0 0.0
        %769 = vmatmul.mubr.f32.gmra.mrb[0].mxu0 %v644
        %v770 = vpop.f32.mrb[0].mxu0
        %v771 = vadd.f32 0.0, %v770
        %v772 = vpop.f32.mrb[0].mxu0
        %773 = vmatprep.mubr.f32.mxu0 0.0
        %774 = vmatmul.mubr.f32.gmra.mrb[0].mxu0 %v645
        %v775 = vpop.f32.mrb[0].mxu0
        %v776 = vadd.f32 0.0, %v775
        %v777 = vpop.f32.mrb[0].mxu0
        %778 = vmatprep.mubr.f32.mxu0 0.0
        %779 = vmatmul.mubr.f32.gmra.mrb[0].mxu0 %v646
        %v780 = vpop.f32.mrb[0].mxu0
        %v781 = vadd.f32 0.0, %v780
        %v782 = vpop.f32.mrb[0].mxu0
        %783 = vmatprep.mubr.f32.mxu0 0.0
        %784 = vmatmul.mubr.f32.gmra.mrb[0].mxu0 %v647
        %v785 = vpop.f32.mrb[0].mxu0
        %v786 = vadd.f32 0.0, %v785
        %v787 = vpop.f32.mrb[0].mxu0
        %788 = vmatprep.mubr.f32.mxu0 0.0
        %789 = vmatmul.mubr.f32.gmra.mrb[0].mxu0 %v648
        %v790 = vpop.f32.mrb[0].mxu0
        %v791 = vadd.f32 0.0, %v790
        %v792 = vpop.f32.mrb[0].mxu0
        %793 = vmatprep.mubr.f32.mxu0 0.0
        %794 = vmatmul.mubr.f32.gmra.mrb[0].mxu0 %v649
        %v795 = vpop.f32.mrb[0].mxu0
        %v796 = vadd.f32 0.0, %v795
        %v797 = vpop.f32.mrb[0].mxu0
        %798 = vmatprep.mubr.f32.mxu0 0.0
        %799 = vmatmul.mubr.f32.gmra.mrb[0].mxu0 %v650
        %v800 = vpop.f32.mrb[0].mxu0
        %v801 = vadd.f32 0.0, %v800
        %v802 = vpop.f32.mrb[0].mxu0
        %803 = vmatprep.mubr.f32.mxu0 0.0
        %804 = vmatmul.mubr.f32.gmra.mrb[0].mxu0 %v651
        %v805 = vpop.f32.mrb[0].mxu0
        %v806 = vadd.f32 0.0, %v805
        %v807 = vpop.f32.mrb[0].mxu0
        %808 = vmatprep.mubr.f32.mxu0 0.0
        %809 = vmatmul.mubr.f32.gmra.mrb[0].mxu0 %v652
        %v810 = vpop.f32.mrb[0].mxu0
        %v811 = vadd.f32 0.0, %v810
        %v812 = vpop.f32.mrb[0].mxu0
        %813 = vdwg.mxu0
        %v814 = vld [vmem:[%s4] sm:$0xff]
        %v815 = vld [vmem:[%s5] sm:$0x1]
        %v817 = vlaneseq
        %v818 = vshrl.u32 %v817, 7
        %v819 = vsub.s32 0, %v818
        %v820 = vrot.slane %v815, %v819
        %vm822 = vcmask 64512
        %v824 = vsel %vm822, %v736, 0
        %v827 = vsel %vm822, %v741, 0
        %v830 = vsel %vm822, %v746, 0
        %v833 = vsel %vm822, %v751, 0
        %v836 = vsel %vm822, %v756, 0
        %v839 = vsel %vm822, %v761, 0
        %v842 = vsel %vm822, %v766, 0
        %v845 = vsel %vm822, %v771, 0
        %v848 = vsel %vm822, %v776, 0
        %v851 = vsel %vm822, %v781, 0
        %v854 = vsel %vm822, %v786, 0
        %v857 = vsel %vm822, %v791, 0
        %v860 = vsel %vm822, %v796, 0
        %v863 = vsel %vm822, %v801, 0
        %v866 = vsel %vm822, %v806, 0
        %v869 = vsel %vm822, %v811, 0
        %871 = vmatprep.subr.mxu0 0.0
        %872 = vmatpush1.msra.mxu0 %v814
        %873 = vmatprep.subr.mxu0 0.0
        %874 = vmatpush1.msra.mxu0 0.0
        %875 = vmatprep.subr.mxu0 0.0
        %876 = vmatpush1.msra.mxu0 0.0
        %877 = vmatprep.subr.mxu0 0.0
        %878 = vmatpush1.msra.mxu0 0.0
        %879 = vmatprep.subr.mxu0 0.0
        %880 = vmatpush1.msra.mxu0 0.0
        %881 = vmatprep.subr.mxu0 0.0
        %882 = vmatpush1.msra.mxu0 0.0
        %883 = vmatprep.subr.mxu0 0.0
        %884 = vmatpush1.msra.mxu0 0.0
        %885 = vmatprep.subr.mxu0 0.0
        %886 = vmatpush1.msra.mxu0 0.0
        %887 = vmatprep.subr.mxu0 0.0
        %888 = vmatpush1.msra.mxu0 0.0
        %889 = vmatprep.subr.mxu0 0.0
        %890 = vmatpush1.msra.mxu0 0.0
        %891 = vmatprep.subr.mxu0 0.0
        %892 = vmatpush1.msra.mxu0 0.0
        %893 = vmatprep.subr.mxu0 0.0
        %894 = vmatpush1.msra.mxu0 0.0
        %895 = vmatprep.subr.mxu0 0.0
        %896 = vmatpush1.msra.mxu0 0.0
        %897 = vmatprep.subr.mxu0 0.0
        %898 = vmatpush1.msra.mxu0 0.0
        %899 = vmatprep.subr.mxu0 0.0
        %900 = vmatpush1.msra.mxu0 0.0
        %901 = vmatprep.subr.mxu0 0.0
        %902 = vmatpush1.msra.mxu0 0.0
        %903 = vmatprep.subr.mxu0 0.0
        %904 = vmatpush1.msra.mxu0 0.0
        %905 = vmatprep.subr.mxu0 0.0
        %906 = vmatpush1.msra.mxu0 0.0
        %907 = vmatprep.subr.mxu0 0.0
        %908 = vmatpush1.msra.mxu0 0.0
        %909 = vmatprep.subr.mxu0 0.0
        %910 = vmatpush1.msra.mxu0 0.0
        %911 = vmatprep.subr.mxu0 0.0
        %912 = vmatpush1.msra.mxu0 0.0
        %913 = vmatprep.subr.mxu0 0.0
        %914 = vmatpush1.msra.mxu0 0.0
        %915 = vmatprep.subr.mxu0 0.0
        %916 = vmatpush1.msra.mxu0 0.0
        %917 = vmatprep.subr.mxu0 0.0
        %918 = vmatpush1.msra.mxu0 0.0
        %919 = vmatprep.subr.mxu0 0.0
        %920 = vmatpush1.msra.mxu0 0.0
        %921 = vmatprep.subr.mxu0 0.0
        %922 = vmatpush1.msra.mxu0 0.0
        %923 = vmatprep.subr.mxu0 0.0
        %924 = vmatpush1.msra.mxu0 0.0
        %925 = vmatprep.subr.mxu0 0.0
        %926 = vmatpush1.msra.mxu0 0.0
        %927 = vmatprep.subr.mxu0 0.0
        %928 = vmatpush1.msra.mxu0 0.0
        %929 = vmatprep.subr.mxu0 0.0
        %930 = vmatpush1.msra.mxu0 0.0
        %931 = vmatprep.subr.mxu0 0.0
        %932 = vmatpush1.msra.mxu0 0.0
        %933 = vmatprep.subr.mxu0 0.0
        %934 = vmatpush1.msra.mxu0 0.0
        %935 = vmatprep.mubr.f32.mxu0 0.0
        %936 = vmatmul.mubr.f32.gmra.mrb[0].mxu0 %v824
        %v937 = vpop.f32.mrb[0].mxu0
        %v938 = vadd.f32 %v820, %v937
        %v939 = vpop.f32.mrb[0].mxu0
        %940 = vmatprep.mubr.f32.mxu0 0.0
        %941 = vmatmul.mubr.f32.gmra.mrb[0].mxu0 %v827
        %v942 = vpop.f32.mrb[0].mxu0
        %v943 = vadd.f32 %v820, %v942
        %v944 = vpop.f32.mrb[0].mxu0
        %945 = vmatprep.mubr.f32.mxu0 0.0
        %946 = vmatmul.mubr.f32.gmra.mrb[0].mxu0 %v830
        %v947 = vpop.f32.mrb[0].mxu0
        %v948 = vadd.f32 %v820, %v947
        %v949 = vpop.f32.mrb[0].mxu0
        %950 = vmatprep.mubr.f32.mxu0 0.0
        %951 = vmatmul.mubr.f32.gmra.mrb[0].mxu0 %v833
        %v952 = vpop.f32.mrb[0].mxu0
        %v953 = vadd.f32 %v820, %v952
        %v954 = vpop.f32.mrb[0].mxu0
        %955 = vmatprep.mubr.f32.mxu0 0.0
        %956 = vmatmul.mubr.f32.gmra.mrb[0].mxu0 %v836
        %v957 = vpop.f32.mrb[0].mxu0
        %v958 = vadd.f32 %v820, %v957
        %v959 = vpop.f32.mrb[0].mxu0
        %960 = vmatprep.mubr.f32.mxu0 0.0
        %961 = vmatmul.mubr.f32.gmra.mrb[0].mxu0 %v839
        %v962 = vpop.f32.mrb[0].mxu0
        %v963 = vadd.f32 %v820, %v962
        %v964 = vpop.f32.mrb[0].mxu0
        %965 = vmatprep.mubr.f32.mxu0 0.0
        %966 = vmatmul.mubr.f32.gmra.mrb[0].mxu0 %v842
        %v967 = vpop.f32.mrb[0].mxu0
        %v968 = vadd.f32 %v820, %v967
        %v969 = vpop.f32.mrb[0].mxu0
        %970 = vmatprep.mubr.f32.mxu0 0.0
        %971 = vmatmul.mubr.f32.gmra.mrb[0].mxu0 %v845
        %v972 = vpop.f32.mrb[0].mxu0
        %v973 = vadd.f32 %v820, %v972
        %v974 = vpop.f32.mrb[0].mxu0
        %975 = vmatprep.mubr.f32.mxu0 0.0
        %976 = vmatmul.mubr.f32.gmra.mrb[0].mxu0 %v848
        %v977 = vpop.f32.mrb[0].mxu0
        %v978 = vadd.f32 %v820, %v977
        %v979 = vpop.f32.mrb[0].mxu0
        %980 = vmatprep.mubr.f32.mxu0 0.0
        %981 = vmatmul.mubr.f32.gmra.mrb[0].mxu0 %v851
        %v982 = vpop.f32.mrb[0].mxu0
        %v983 = vadd.f32 %v820, %v982
        %v984 = vpop.f32.mrb[0].mxu0
        %985 = vmatprep.mubr.f32.mxu0 0.0
        %986 = vmatmul.mubr.f32.gmra.mrb[0].mxu0 %v854
        %v987 = vpop.f32.mrb[0].mxu0
        %v988 = vadd.f32 %v820, %v987
        %v989 = vpop.f32.mrb[0].mxu0
        %990 = vmatprep.mubr.f32.mxu0 0.0
        %991 = vmatmul.mubr.f32.gmra.mrb[0].mxu0 %v857
        %v992 = vpop.f32.mrb[0].mxu0
        %v993 = vadd.f32 %v820, %v992
        %v994 = vpop.f32.mrb[0].mxu0
        %995 = vmatprep.mubr.f32.mxu0 0.0
        %996 = vmatmul.mubr.f32.gmra.mrb[0].mxu0 %v860
        %v997 = vpop.f32.mrb[0].mxu0
        %v998 = vadd.f32 %v820, %v997
        %v999 = vpop.f32.mrb[0].mxu0
        %1000 = vmatprep.mubr.f32.mxu0 0.0
        %1001 = vmatmul.mubr.f32.gmra.mrb[0].mxu0 %v863
        %v1002 = vpop.f32.mrb[0].mxu0
        %v1003 = vadd.f32 %v820, %v1002
        %v1004 = vpop.f32.mrb[0].mxu0
        %1005 = vmatprep.mubr.f32.mxu0 0.0
        %1006 = vmatmul.mubr.f32.gmra.mrb[0].mxu0 %v866
        %v1007 = vpop.f32.mrb[0].mxu0
        %v1008 = vadd.f32 %v820, %v1007
        %v1009 = vpop.f32.mrb[0].mxu0
        %1010 = vmatprep.mubr.f32.mxu0 0.0
        %1011 = vmatmul.mubr.f32.gmra.mrb[0].mxu0 %v869
        %v1012 = vpop.f32.mrb[0].mxu0
        %v1013 = vadd.f32 %v820, %v1012
        %v1014 = vpop.f32.mrb[0].mxu0
        %1015 = vdwg.mxu0
        %v1016 = vmax.f32 %v938, 0.0
        %v1017 = vmax.f32 %v943, 0.0
        %v1018 = vmax.f32 %v948, 0.0
        %v1019 = vmax.f32 %v953, 0.0
        %v1020 = vmax.f32 %v958, 0.0
        %v1021 = vmax.f32 %v963, 0.0
        %v1022 = vmax.f32 %v968, 0.0
        %v1023 = vmax.f32 %v973, 0.0
        %v1024 = vmax.f32 %v978, 0.0
        %v1025 = vmax.f32 %v983, 0.0
        %v1026 = vmax.f32 %v988, 0.0
        %v1027 = vmax.f32 %v993, 0.0
        %v1028 = vmax.f32 %v998, 0.0
        %v1029 = vmax.f32 %v1003, 0.0
        %v1030 = vmax.f32 %v1008, 0.0
        %v1031 = vmax.f32 %v1013, 0.0
        %1032 = vmatprep.subr.mxu0 0.0
        %1033 = vmatpush1.msra.mxu0 %v1016
        %1034 = vmatprep.subr.mxu0 0.0
        %1035 = vmatpush1.msra.mxu0 %v1017
        %1036 = vmatprep.subr.mxu0 0.0
        %1037 = vmatpush1.msra.mxu0 %v1018
        %1038 = vmatprep.subr.mxu0 0.0
        %1039 = vmatpush1.msra.mxu0 %v1019
        %1040 = vmatprep.subr.mxu0 0.0
        %1041 = vmatpush1.msra.mxu0 %v1020
        %1042 = vmatprep.subr.mxu0 0.0
        %1043 = vmatpush1.msra.mxu0 %v1021
        %1044 = vmatprep.subr.mxu0 0.0
        %1045 = vmatpush1.msra.mxu0 %v1022
        %1046 = vmatprep.subr.mxu0 0.0
        %1047 = vmatpush1.msra.mxu0 %v1023
        %1048 = vmatprep.subr.mxu0 0.0
        %1049 = vmatpush1.msra.mxu0 %v1024
        %1050 = vmatprep.subr.mxu0 0.0
        %1051 = vmatpush1.msra.mxu0 %v1025
        %1052 = vmatprep.subr.mxu0 0.0
        %1053 = vmatpush1.msra.mxu0 %v1026
        %1054 = vmatprep.subr.mxu0 0.0
        %1055 = vmatpush1.msra.mxu0 %v1027
        %1056 = vmatprep.subr.mxu0 0.0
        %1057 = vmatpush1.msra.mxu0 %v1028
        %1058 = vmatprep.subr.mxu0 0.0
        %1059 = vmatpush1.msra.mxu0 %v1029
        %1060 = vmatprep.subr.mxu0 0.0
        %1061 = vmatpush1.msra.mxu0 %v1030
        %1062 = vmatprep.subr.mxu0 0.0
        %1063 = vmatpush1.msra.mxu0 %v1031
        %1064 = vmatprep.subr.mxu0 0.0
        %1065 = vmatpush1.msra.mxu0 0.0
        %1066 = vmatprep.subr.mxu0 0.0
        %1067 = vmatpush1.msra.mxu0 0.0
        %1068 = vmatprep.subr.mxu0 0.0
        %1069 = vmatpush1.msra.mxu0 0.0
        %1070 = vmatprep.subr.mxu0 0.0
        %1071 = vmatpush1.msra.mxu0 0.0
        %1072 = vmatprep.subr.mxu0 0.0
        %1073 = vmatpush1.msra.mxu0 0.0
        %1074 = vmatprep.subr.mxu0 0.0
        %1075 = vmatpush1.msra.mxu0 0.0
        %1076 = vmatprep.subr.mxu0 0.0
        %1077 = vmatpush1.msra.mxu0 0.0
        %1078 = vmatprep.subr.mxu0 0.0
        %1079 = vmatpush1.msra.mxu0 0.0
        %1080 = vmatprep.subr.mxu0 0.0
        %1081 = vmatpush1.msra.mxu0 0.0
        %1082 = vmatprep.subr.mxu0 0.0
        %1083 = vmatpush1.msra.mxu0 0.0
        %1084 = vmatprep.subr.mxu0 0.0
        %1085 = vmatpush1.msra.mxu0 0.0
        %1086 = vmatprep.subr.mxu0 0.0
        %1087 = vmatpush1.msra.mxu0 0.0
        %1088 = vmatprep.subr.mxu0 0.0
        %1089 = vmatpush1.msra.mxu0 0.0
        %1090 = vmatprep.subr.mxu0 0.0
        %1091 = vmatpush1.msra.mxu0 0.0
        %1092 = vmatprep.subr.mxu0 0.0
        %1093 = vmatpush1.msra.mxu0 0.0
        %1094 = vmatprep.subr.mxu0 0.0
        %1095 = vmatpush1.msra.mxu0 0.0
        %1096 = vmatprep.mubr.f32.mxu0 0.0
        %1097 = vmatmul.mubr.f32.gmra.mrb[0].mxu0 %v637
        %v1098 = vpop.f32.mrb[0].mxu0
        %v1099 = vadd.f32 0.0, %v1098
        %v1100 = vpop.f32.mrb[0].mxu0
        %1101 = vmatprep.mubr.f32.mxu0 0.0
        %1102 = vmatmul.mubr.f32.gmra.mrb[0].mxu0 %v638
        %v1103 = vpop.f32.mrb[0].mxu0
        %v1104 = vadd.f32 0.0, %v1103
        %v1105 = vpop.f32.mrb[0].mxu0
        %1106 = vmatprep.mubr.f32.mxu0 0.0
        %1107 = vmatmul.mubr.f32.gmra.mrb[0].mxu0 %v639
        %v1108 = vpop.f32.mrb[0].mxu0
        %v1109 = vadd.f32 0.0, %v1108
        %v1110 = vpop.f32.mrb[0].mxu0
        %1111 = vmatprep.mubr.f32.mxu0 0.0
        %1112 = vmatmul.mubr.f32.gmra.mrb[0].mxu0 %v640
        %v1113 = vpop.f32.mrb[0].mxu0
        %v1114 = vadd.f32 0.0, %v1113
        %v1115 = vpop.f32.mrb[0].mxu0
        %1116 = vmatprep.mubr.f32.mxu0 0.0
        %1117 = vmatmul.mubr.f32.gmra.mrb[0].mxu0 %v641
        %v1118 = vpop.f32.mrb[0].mxu0
        %v1119 = vadd.f32 0.0, %v1118
        %v1120 = vpop.f32.mrb[0].mxu0
        %1121 = vmatprep.mubr.f32.mxu0 0.0
        %1122 = vmatmul.mubr.f32.gmra.mrb[0].mxu0 %v642
        %v1123 = vpop.f32.mrb[0].mxu0
        %v1124 = vadd.f32 0.0, %v1123
        %v1125 = vpop.f32.mrb[0].mxu0
        %1126 = vmatprep.mubr.f32.mxu0 0.0
        %1127 = vmatmul.mubr.f32.gmra.mrb[0].mxu0 %v643
        %v1128 = vpop.f32.mrb[0].mxu0
        %v1129 = vadd.f32 0.0, %v1128
        %v1130 = vpop.f32.mrb[0].mxu0
        %1131 = vmatprep.mubr.f32.mxu0 0.0
        %1132 = vmatmul.mubr.f32.gmra.mrb[0].mxu0 %v644
        %v1133 = vpop.f32.mrb[0].mxu0
        %v1134 = vadd.f32 0.0, %v1133
        %v1135 = vpop.f32.mrb[0].mxu0
        %1136 = vmatprep.mubr.f32.mxu0 0.0
        %1137 = vmatmul.mubr.f32.gmra.mrb[0].mxu0 %v645
        %v1138 = vpop.f32.mrb[0].mxu0
        %v1139 = vadd.f32 0.0, %v1138
        %v1140 = vpop.f32.mrb[0].mxu0
        %1141 = vmatprep.mubr.f32.mxu0 0.0
        %1142 = vmatmul.mubr.f32.gmra.mrb[0].mxu0 %v646
        %v1143 = vpop.f32.mrb[0].mxu0
        %v1144 = vadd.f32 0.0, %v1143
        %v1145 = vpop.f32.mrb[0].mxu0
        %1146 = vmatprep.mubr.f32.mxu0 0.0
        %1147 = vmatmul.mubr.f32.gmra.mrb[0].mxu0 %v647
        %v1148 = vpop.f32.mrb[0].mxu0
        %v1149 = vadd.f32 0.0, %v1148
        %v1150 = vpop.f32.mrb[0].mxu0
        %1151 = vmatprep.mubr.f32.mxu0 0.0
        %1152 = vmatmul.mubr.f32.gmra.mrb[0].mxu0 %v648
        %v1153 = vpop.f32.mrb[0].mxu0
        %v1154 = vadd.f32 0.0, %v1153
        %v1155 = vpop.f32.mrb[0].mxu0
        %1156 = vmatprep.mubr.f32.mxu0 0.0
        %1157 = vmatmul.mubr.f32.gmra.mrb[0].mxu0 %v649
        %v1158 = vpop.f32.mrb[0].mxu0
        %v1159 = vadd.f32 0.0, %v1158
        %v1160 = vpop.f32.mrb[0].mxu0
        %1161 = vmatprep.mubr.f32.mxu0 0.0
        %1162 = vmatmul.mubr.f32.gmra.mrb[0].mxu0 %v650
        %v1163 = vpop.f32.mrb[0].mxu0
        %v1164 = vadd.f32 0.0, %v1163
        %v1165 = vpop.f32.mrb[0].mxu0
        %1166 = vmatprep.mubr.f32.mxu0 0.0
        %1167 = vmatmul.mubr.f32.gmra.mrb[0].mxu0 %v651
        %v1168 = vpop.f32.mrb[0].mxu0
        %v1169 = vadd.f32 0.0, %v1168
        %v1170 = vpop.f32.mrb[0].mxu0
        %1171 = vmatprep.mubr.f32.mxu0 0.0
        %1172 = vmatmul.mubr.f32.gmra.mrb[0].mxu0 %v652
        %v1173 = vpop.f32.mrb[0].mxu0
        %v1174 = vadd.f32 0.0, %v1173
        %v1175 = vpop.f32.mrb[0].mxu0
        %1176 = vdwg.mxu0
        %v1177 = vld [vmem:[%s6] sm:$0xff]
        %v1178 = vld [vmem:[%s6 + $0x8] sm:$0xff]
        %v1179 = vld [vmem:[%s6 + $0x10] sm:$0xff]
        %v1180 = vld [vmem:[%s6 + $0x18] sm:$0xff]
        %v1181 = vld [vmem:[%s7] sm:$0x1]
        %v1183 = vlaneseq
        %v1184 = vshrl.u32 %v1183, 7
        %v1185 = vsub.s32 0, %v1184
        %v1186 = vrot.slane %v1181, %v1185
        %vm1188 = vcmask 261120
        %v1190 = vsel %vm1188, %v1099, 0
        %v1193 = vsel %vm1188, %v1104, 0
        %v1196 = vsel %vm1188, %v1109, 0
        %v1199 = vsel %vm1188, %v1114, 0
        %v1202 = vsel %vm1188, %v1119, 0
        %v1205 = vsel %vm1188, %v1124, 0
        %v1208 = vsel %vm1188, %v1129, 0
        %v1211 = vsel %vm1188, %v1134, 0
        %v1214 = vsel %vm1188, %v1139, 0
        %v1217 = vsel %vm1188, %v1144, 0
        %v1220 = vsel %vm1188, %v1149, 0
        %v1223 = vsel %vm1188, %v1154, 0
        %v1226 = vsel %vm1188, %v1159, 0
        %v1229 = vsel %vm1188, %v1164, 0
        %v1232 = vsel %vm1188, %v1169, 0
        %v1235 = vsel %vm1188, %v1174, 0
        %1237 = vmatprep.subr.mxu0 0.0
        %1238 = vmatpush1.msra.mxu0 %v1177
        %1239 = vmatprep.subr.mxu0 0.0
        %1240 = vmatpush1.msra.mxu0 %v1178
        %1241 = vmatprep.subr.mxu0 0.0
        %1242 = vmatpush1.msra.mxu0 %v1179
        %1243 = vmatprep.subr.mxu0 0.0
        %1244 = vmatpush1.msra.mxu0 %v1180
        %1245 = vmatprep.subr.mxu0 0.0
        %1246 = vmatpush1.msra.mxu0 0.0
        %1247 = vmatprep.subr.mxu0 0.0
        %1248 = vmatpush1.msra.mxu0 0.0
        %1249 = vmatprep.subr.mxu0 0.0
        %1250 = vmatpush1.msra.mxu0 0.0
        %1251 = vmatprep.subr.mxu0 0.0
        %1252 = vmatpush1.msra.mxu0 0.0
        %1253 = vmatprep.subr.mxu0 0.0
        %1254 = vmatpush1.msra.mxu0 0.0
        %1255 = vmatprep.subr.mxu0 0.0
        %1256 = vmatpush1.msra.mxu0 0.0
        %1257 = vmatprep.subr.mxu0 0.0
        %1258 = vmatpush1.msra.mxu0 0.0
        %1259 = vmatprep.subr.mxu0 0.0
        %1260 = vmatpush1.msra.mxu0 0.0
        %1261 = vmatprep.subr.mxu0 0.0
        %1262 = vmatpush1.msra.mxu0 0.0
        %1263 = vmatprep.subr.mxu0 0.0
        %1264 = vmatpush1.msra.mxu0 0.0
        %1265 = vmatprep.subr.mxu0 0.0
        %1266 = vmatpush1.msra.mxu0 0.0
        %1267 = vmatprep.subr.mxu0 0.0
        %1268 = vmatpush1.msra.mxu0 0.0
        %1269 = vmatprep.subr.mxu0 0.0
        %1270 = vmatpush1.msra.mxu0 0.0
        %1271 = vmatprep.subr.mxu0 0.0
        %1272 = vmatpush1.msra.mxu0 0.0
        %1273 = vmatprep.subr.mxu0 0.0
        %1274 = vmatpush1.msra.mxu0 0.0
        %1275 = vmatprep.subr.mxu0 0.0
        %1276 = vmatpush1.msra.mxu0 0.0
        %1277 = vmatprep.subr.mxu0 0.0
        %1278 = vmatpush1.msra.mxu0 0.0
        %1279 = vmatprep.subr.mxu0 0.0
        %1280 = vmatpush1.msra.mxu0 0.0
        %1281 = vmatprep.subr.mxu0 0.0
        %1282 = vmatpush1.msra.mxu0 0.0
        %1283 = vmatprep.subr.mxu0 0.0
        %1284 = vmatpush1.msra.mxu0 0.0
        %1285 = vmatprep.subr.mxu0 0.0
        %1286 = vmatpush1.msra.mxu0 0.0
        %1287 = vmatprep.subr.mxu0 0.0
        %1288 = vmatpush1.msra.mxu0 0.0
        %1289 = vmatprep.subr.mxu0 0.0
        %1290 = vmatpush1.msra.mxu0 0.0
        %1291 = vmatprep.subr.mxu0 0.0
        %1292 = vmatpush1.msra.mxu0 0.0
        %1293 = vmatprep.subr.mxu0 0.0
        %1294 = vmatpush1.msra.mxu0 0.0
        %1295 = vmatprep.subr.mxu0 0.0
        %1296 = vmatpush1.msra.mxu0 0.0
        %1297 = vmatprep.subr.mxu0 0.0
        %1298 = vmatpush1.msra.mxu0 0.0
        %1299 = vmatprep.subr.mxu0 0.0
        %1300 = vmatpush1.msra.mxu0 0.0
        %1301 = vmatprep.mubr.f32.mxu0 0.0
        %1302 = vmatmul.mubr.f32.gmra.mrb[0].mxu0 %v1190
        %v1303 = vpop.f32.mrb[0].mxu0
        %v1304 = vadd.f32 %v1186, %v1303
        %v1305 = vpop.f32.mrb[0].mxu0
        %1306 = vmatprep.mubr.f32.mxu0 0.0
        %1307 = vmatmul.mubr.f32.gmra.mrb[0].mxu0 %v1193
        %v1308 = vpop.f32.mrb[0].mxu0
        %v1309 = vadd.f32 %v1186, %v1308
        %v1310 = vpop.f32.mrb[0].mxu0
        %1311 = vmatprep.mubr.f32.mxu0 0.0
        %1312 = vmatmul.mubr.f32.gmra.mrb[0].mxu0 %v1196
        %v1313 = vpop.f32.mrb[0].mxu0
        %v1314 = vadd.f32 %v1186, %v1313
        %v1315 = vpop.f32.mrb[0].mxu0
        %1316 = vmatprep.mubr.f32.mxu0 0.0
        %1317 = vmatmul.mubr.f32.gmra.mrb[0].mxu0 %v1199
        %v1318 = vpop.f32.mrb[0].mxu0
        %v1319 = vadd.f32 %v1186, %v1318
        %v1320 = vpop.f32.mrb[0].mxu0
        %1321 = vmatprep.mubr.f32.mxu0 0.0
        %1322 = vmatmul.mubr.f32.gmra.mrb[0].mxu0 %v1202
        %v1323 = vpop.f32.mrb[0].mxu0
        %v1324 = vadd.f32 %v1186, %v1323
        %v1325 = vpop.f32.mrb[0].mxu0
        %1326 = vmatprep.mubr.f32.mxu0 0.0
        %1327 = vmatmul.mubr.f32.gmra.mrb[0].mxu0 %v1205
        %v1328 = vpop.f32.mrb[0].mxu0
        %v1329 = vadd.f32 %v1186, %v1328
        %v1330 = vpop.f32.mrb[0].mxu0
        %1331 = vmatprep.mubr.f32.mxu0 0.0
        %1332 = vmatmul.mubr.f32.gmra.mrb[0].mxu0 %v1208
        %v1333 = vpop.f32.mrb[0].mxu0
        %v1334 = vadd.f32 %v1186, %v1333
        %v1335 = vpop.f32.mrb[0].mxu0
        %1336 = vmatprep.mubr.f32.mxu0 0.0
        %1337 = vmatmul.mubr.f32.gmra.mrb[0].mxu0 %v1211
        %v1338 = vpop.f32.mrb[0].mxu0
        %v1339 = vadd.f32 %v1186, %v1338
        %v1340 = vpop.f32.mrb[0].mxu0
        %1341 = vmatprep.mubr.f32.mxu0 0.0
        %1342 = vmatmul.mubr.f32.gmra.mrb[0].mxu0 %v1214
        %v1343 = vpop.f32.mrb[0].mxu0
        %v1344 = vadd.f32 %v1186, %v1343
        %v1345 = vpop.f32.mrb[0].mxu0
        %1346 = vmatprep.mubr.f32.mxu0 0.0
        %1347 = vmatmul.mubr.f32.gmra.mrb[0].mxu0 %v1217
        %v1348 = vpop.f32.mrb[0].mxu0
        %v1349 = vadd.f32 %v1186, %v1348
        %v1350 = vpop.f32.mrb[0].mxu0
        %1351 = vmatprep.mubr.f32.mxu0 0.0
        %1352 = vmatmul.mubr.f32.gmra.mrb[0].mxu0 %v1220
        %v1353 = vpop.f32.mrb[0].mxu0
        %v1354 = vadd.f32 %v1186, %v1353
        %v1355 = vpop.f32.mrb[0].mxu0
        %1356 = vmatprep.mubr.f32.mxu0 0.0
        %1357 = vmatmul.mubr.f32.gmra.mrb[0].mxu0 %v1223
        %v1358 = vpop.f32.mrb[0].mxu0
        %v1359 = vadd.f32 %v1186, %v1358
        %v1360 = vpop.f32.mrb[0].mxu0
        %1361 = vmatprep.mubr.f32.mxu0 0.0
        %1362 = vmatmul.mubr.f32.gmra.mrb[0].mxu0 %v1226
        %v1363 = vpop.f32.mrb[0].mxu0
        %v1364 = vadd.f32 %v1186, %v1363
        %v1365 = vpop.f32.mrb[0].mxu0
        %1366 = vmatprep.mubr.f32.mxu0 0.0
        %1367 = vmatmul.mubr.f32.gmra.mrb[0].mxu0 %v1229
        %v1368 = vpop.f32.mrb[0].mxu0
        %v1369 = vadd.f32 %v1186, %v1368
        %v1370 = vpop.f32.mrb[0].mxu0
        %1371 = vmatprep.mubr.f32.mxu0 0.0
        %1372 = vmatmul.mubr.f32.gmra.mrb[0].mxu0 %v1232
        %v1373 = vpop.f32.mrb[0].mxu0
        %v1374 = vadd.f32 %v1186, %v1373
        %v1375 = vpop.f32.mrb[0].mxu0
        %1376 = vmatprep.mubr.f32.mxu0 0.0
        %1377 = vmatmul.mubr.f32.gmra.mrb[0].mxu0 %v1235
        %v1378 = vpop.f32.mrb[0].mxu0
        %v1379 = vadd.f32 %v1186, %v1378
        %v1380 = vpop.f32.mrb[0].mxu0
        %1381 = vdwg.mxu0
        %v1382 = vmax.f32 %v1304, 0.0
        %v1383 = vmax.f32 %v1309, 0.0
        %v1384 = vmax.f32 %v1314, 0.0
        %v1385 = vmax.f32 %v1319, 0.0
        %v1386 = vmax.f32 %v1324, 0.0
        %v1387 = vmax.f32 %v1329, 0.0
        %v1388 = vmax.f32 %v1334, 0.0
        %v1389 = vmax.f32 %v1339, 0.0
        %v1390 = vmax.f32 %v1344, 0.0
        %v1391 = vmax.f32 %v1349, 0.0
        %v1392 = vmax.f32 %v1354, 0.0
        %v1393 = vmax.f32 %v1359, 0.0
        %v1394 = vmax.f32 %v1364, 0.0
        %v1395 = vmax.f32 %v1369, 0.0
        %v1396 = vmax.f32 %v1374, 0.0
        %v1397 = vmax.f32 %v1379, 0.0
        %1398 = vmatprep.subr.mxu0 0.0
        %1399 = vmatpush1.msra.mxu0 %v1382
        %1400 = vmatprep.subr.mxu0 0.0
        %1401 = vmatpush1.msra.mxu0 %v1383
        %1402 = vmatprep.subr.mxu0 0.0
        %1403 = vmatpush1.msra.mxu0 %v1384
        %1404 = vmatprep.subr.mxu0 0.0
        %1405 = vmatpush1.msra.mxu0 %v1385
        %1406 = vmatprep.subr.mxu0 0.0
        %1407 = vmatpush1.msra.mxu0 %v1386
        %1408 = vmatprep.subr.mxu0 0.0
        %1409 = vmatpush1.msra.mxu0 %v1387
        %1410 = vmatprep.subr.mxu0 0.0
        %1411 = vmatpush1.msra.mxu0 %v1388
        %1412 = vmatprep.subr.mxu0 0.0
        %1413 = vmatpush1.msra.mxu0 %v1389
        %1414 = vmatprep.subr.mxu0 0.0
        %1415 = vmatpush1.msra.mxu0 %v1390
        %1416 = vmatprep.subr.mxu0 0.0
        %1417 = vmatpush1.msra.mxu0 %v1391
        %1418 = vmatprep.subr.mxu0 0.0
        %1419 = vmatpush1.msra.mxu0 %v1392
        %1420 = vmatprep.subr.mxu0 0.0
        %1421 = vmatpush1.msra.mxu0 %v1393
        %1422 = vmatprep.subr.mxu0 0.0
        %1423 = vmatpush1.msra.mxu0 %v1394
        %1424 = vmatprep.subr.mxu0 0.0
        %1425 = vmatpush1.msra.mxu0 %v1395
        %1426 = vmatprep.subr.mxu0 0.0
        %1427 = vmatpush1.msra.mxu0 %v1396
        %1428 = vmatprep.subr.mxu0 0.0
        %1429 = vmatpush1.msra.mxu0 %v1397
        %1430 = vmatprep.subr.mxu0 0.0
        %1431 = vmatpush1.msra.mxu0 0.0
        %1432 = vmatprep.subr.mxu0 0.0
        %1433 = vmatpush1.msra.mxu0 0.0
        %1434 = vmatprep.subr.mxu0 0.0
        %1435 = vmatpush1.msra.mxu0 0.0
        %1436 = vmatprep.subr.mxu0 0.0
        %1437 = vmatpush1.msra.mxu0 0.0
        %1438 = vmatprep.subr.mxu0 0.0
        %1439 = vmatpush1.msra.mxu0 0.0
        %1440 = vmatprep.subr.mxu0 0.0
        %1441 = vmatpush1.msra.mxu0 0.0
        %1442 = vmatprep.subr.mxu0 0.0
        %1443 = vmatpush1.msra.mxu0 0.0
        %1444 = vmatprep.subr.mxu0 0.0
        %1445 = vmatpush1.msra.mxu0 0.0
        %1446 = vmatprep.subr.mxu0 0.0
        %1447 = vmatpush1.msra.mxu0 0.0
        %1448 = vmatprep.subr.mxu0 0.0
        %1449 = vmatpush1.msra.mxu0 0.0
        %1450 = vmatprep.subr.mxu0 0.0
        %1451 = vmatpush1.msra.mxu0 0.0
        %1452 = vmatprep.subr.mxu0 0.0
        %1453 = vmatpush1.msra.mxu0 0.0
        %1454 = vmatprep.subr.mxu0 0.0
        %1455 = vmatpush1.msra.mxu0 0.0
        %1456 = vmatprep.subr.mxu0 0.0
        %1457 = vmatpush1.msra.mxu0 0.0
        %1458 = vmatprep.subr.mxu0 0.0
        %1459 = vmatpush1.msra.mxu0 0.0
        %1460 = vmatprep.subr.mxu0 0.0
        %1461 = vmatpush1.msra.mxu0 0.0
        %1462 = vmatprep.mubr.f32.mxu0 0.0
        %1463 = vmatmul.mubr.f32.gmra.mrb[0].mxu0 %v637
        %v1464 = vpop.f32.mrb[0].mxu0
        %v1465 = vadd.f32 0.0, %v1464
        %v1466 = vpop.f32.mrb[0].mxu0
        %1467 = vmatprep.mubr.f32.mxu0 0.0
        %1468 = vmatmul.mubr.f32.gmra.mrb[0].mxu0 %v638
        %v1469 = vpop.f32.mrb[0].mxu0
        %v1470 = vadd.f32 0.0, %v1469
        %v1471 = vpop.f32.mrb[0].mxu0
        %1472 = vmatprep.mubr.f32.mxu0 0.0
        %1473 = vmatmul.mubr.f32.gmra.mrb[0].mxu0 %v639
        %v1474 = vpop.f32.mrb[0].mxu0
        %v1475 = vadd.f32 0.0, %v1474
        %v1476 = vpop.f32.mrb[0].mxu0
        %1477 = vmatprep.mubr.f32.mxu0 0.0
        %1478 = vmatmul.mubr.f32.gmra.mrb[0].mxu0 %v640
        %v1479 = vpop.f32.mrb[0].mxu0
        %v1480 = vadd.f32 0.0, %v1479
        %v1481 = vpop.f32.mrb[0].mxu0
        %1482 = vmatprep.mubr.f32.mxu0 0.0
        %1483 = vmatmul.mubr.f32.gmra.mrb[0].mxu0 %v641
        %v1484 = vpop.f32.mrb[0].mxu0
        %v1485 = vadd.f32 0.0, %v1484
        %v1486 = vpop.f32.mrb[0].mxu0
        %1487 = vmatprep.mubr.f32.mxu0 0.0
        %1488 = vmatmul.mubr.f32.gmra.mrb[0].mxu0 %v642
        %v1489 = vpop.f32.mrb[0].mxu0
        %v1490 = vadd.f32 0.0, %v1489
        %v1491 = vpop.f32.mrb[0].mxu0
        %1492 = vmatprep.mubr.f32.mxu0 0.0
        %1493 = vmatmul.mubr.f32.gmra.mrb[0].mxu0 %v643
        %v1494 = vpop.f32.mrb[0].mxu0
        %v1495 = vadd.f32 0.0, %v1494
        %v1496 = vpop.f32.mrb[0].mxu0
        %1497 = vmatprep.mubr.f32.mxu0 0.0
        %1498 = vmatmul.mubr.f32.gmra.mrb[0].mxu0 %v644
        %v1499 = vpop.f32.mrb[0].mxu0
        %v1500 = vadd.f32 0.0, %v1499
        %v1501 = vpop.f32.mrb[0].mxu0
        %1502 = vmatprep.mubr.f32.mxu0 0.0
        %1503 = vmatmul.mubr.f32.gmra.mrb[0].mxu0 %v645
        %v1504 = vpop.f32.mrb[0].mxu0
        %v1505 = vadd.f32 0.0, %v1504
        %v1506 = vpop.f32.mrb[0].mxu0
        %1507 = vmatprep.mubr.f32.mxu0 0.0
        %1508 = vmatmul.mubr.f32.gmra.mrb[0].mxu0 %v646
        %v1509 = vpop.f32.mrb[0].mxu0
        %v1510 = vadd.f32 0.0, %v1509
        %v1511 = vpop.f32.mrb[0].mxu0
        %1512 = vmatprep.mubr.f32.mxu0 0.0
        %1513 = vmatmul.mubr.f32.gmra.mrb[0].mxu0 %v647
        %v1514 = vpop.f32.mrb[0].mxu0
        %v1515 = vadd.f32 0.0, %v1514
        %v1516 = vpop.f32.mrb[0].mxu0
        %1517 = vmatprep.mubr.f32.mxu0 0.0
        %1518 = vmatmul.mubr.f32.gmra.mrb[0].mxu0 %v648
        %v1519 = vpop.f32.mrb[0].mxu0
        %v1520 = vadd.f32 0.0, %v1519
        %v1521 = vpop.f32.mrb[0].mxu0
        %1522 = vmatprep.mubr.f32.mxu0 0.0
        %1523 = vmatmul.mubr.f32.gmra.mrb[0].mxu0 %v649
        %v1524 = vpop.f32.mrb[0].mxu0
        %v1525 = vadd.f32 0.0, %v1524
        %v1526 = vpop.f32.mrb[0].mxu0
        %1527 = vmatprep.mubr.f32.mxu0 0.0
        %1528 = vmatmul.mubr.f32.gmra.mrb[0].mxu0 %v650
        %v1529 = vpop.f32.mrb[0].mxu0
        %v1530 = vadd.f32 0.0, %v1529
        %v1531 = vpop.f32.mrb[0].mxu0
        %1532 = vmatprep.mubr.f32.mxu0 0.0
        %1533 = vmatmul.mubr.f32.gmra.mrb[0].mxu0 %v651
        %v1534 = vpop.f32.mrb[0].mxu0
        %v1535 = vadd.f32 0.0, %v1534
        %v1536 = vpop.f32.mrb[0].mxu0
        %1537 = vmatprep.mubr.f32.mxu0 0.0
        %1538 = vmatmul.mubr.f32.gmra.mrb[0].mxu0 %v652
        %v1539 = vpop.f32.mrb[0].mxu0
        %v1540 = vadd.f32 0.0, %v1539
        %v1541 = vpop.f32.mrb[0].mxu0
        %1542 = vdwg.mxu0
        %v1543 = vld [vmem:[%s8] sm:$0xff]
        %v1544 = vld [vmem:[%s8 + $0x8] sm:$0xff]
        %v1545 = vld [vmem:[%s8 + $0x10] sm:$0xff]
        %v1546 = vld [vmem:[%s8 + $0x18] sm:$0xff]
        %v1547 = vld [vmem:[%s9] sm:$0x1]
        %v1549 = vlaneseq
        %v1550 = vshrl.u32 %v1549, 7
        %v1551 = vsub.s32 0, %v1550
        %v1552 = vrot.slane %v1547, %v1551
        %v1555 = vsel %vm1188, %v1465, 0
        %v1558 = vsel %vm1188, %v1470, 0
        %v1561 = vsel %vm1188, %v1475, 0
        %v1564 = vsel %vm1188, %v1480, 0
        %v1567 = vsel %vm1188, %v1485, 0
        %v1570 = vsel %vm1188, %v1490, 0
        %v1573 = vsel %vm1188, %v1495, 0
        %v1576 = vsel %vm1188, %v1500, 0
        %v1579 = vsel %vm1188, %v1505, 0
        %v1582 = vsel %vm1188, %v1510, 0
        %v1585 = vsel %vm1188, %v1515, 0
        %v1588 = vsel %vm1188, %v1520, 0
        %v1591 = vsel %vm1188, %v1525, 0
        %v1594 = vsel %vm1188, %v1530, 0
        %v1597 = vsel %vm1188, %v1535, 0
        %v1600 = vsel %vm1188, %v1540, 0
        %1602 = vmatprep.subr.mxu0 0.0
        %1603 = vmatpush1.msra.mxu0 %v1543
        %1604 = vmatprep.subr.mxu0 0.0
        %1605 = vmatpush1.msra.mxu0 %v1544
        %1606 = vmatprep.subr.mxu0 0.0
        %1607 = vmatpush1.msra.mxu0 %v1545
        %1608 = vmatprep.subr.mxu0 0.0
        %1609 = vmatpush1.msra.mxu0 %v1546
        %1610 = vmatprep.subr.mxu0 0.0
        %1611 = vmatpush1.msra.mxu0 0.0
        %1612 = vmatprep.subr.mxu0 0.0
        %1613 = vmatpush1.msra.mxu0 0.0
        %1614 = vmatprep.subr.mxu0 0.0
        %1615 = vmatpush1.msra.mxu0 0.0
        %1616 = vmatprep.subr.mxu0 0.0
        %1617 = vmatpush1.msra.mxu0 0.0
        %1618 = vmatprep.subr.mxu0 0.0
        %1619 = vmatpush1.msra.mxu0 0.0
        %1620 = vmatprep.subr.mxu0 0.0
        %1621 = vmatpush1.msra.mxu0 0.0
        %1622 = vmatprep.subr.mxu0 0.0
        %1623 = vmatpush1.msra.mxu0 0.0
        %1624 = vmatprep.subr.mxu0 0.0
        %1625 = vmatpush1.msra.mxu0 0.0
        %1626 = vmatprep.subr.mxu0 0.0
        %1627 = vmatpush1.msra.mxu0 0.0
        %1628 = vmatprep.subr.mxu0 0.0
        %1629 = vmatpush1.msra.mxu0 0.0
        %1630 = vmatprep.subr.mxu0 0.0
        %1631 = vmatpush1.msra.mxu0 0.0
        %1632 = vmatprep.subr.mxu0 0.0
        %1633 = vmatpush1.msra.mxu0 0.0
        %1634 = vmatprep.subr.mxu0 0.0
        %1635 = vmatpush1.msra.mxu0 0.0
        %1636 = vmatprep.subr.mxu0 0.0
        %1637 = vmatpush1.msra.mxu0 0.0
        %1638 = vmatprep.subr.mxu0 0.0
        %1639 = vmatpush1.msra.mxu0 0.0
        %1640 = vmatprep.subr.mxu0 0.0
        %1641 = vmatpush1.msra.mxu0 0.0
        %1642 = vmatprep.subr.mxu0 0.0
        %1643 = vmatpush1.msra.mxu0 0.0
        %1644 = vmatprep.subr.mxu0 0.0
        %1645 = vmatpush1.msra.mxu0 0.0
        %1646 = vmatprep.subr.mxu0 0.0
        %1647 = vmatpush1.msra.mxu0 0.0
        %1648 = vmatprep.subr.mxu0 0.0
        %1649 = vmatpush1.msra.mxu0 0.0
        %1650 = vmatprep.subr.mxu0 0.0
        %1651 = vmatpush1.msra.mxu0 0.0
        %1652 = vmatprep.subr.mxu0 0.0
        %1653 = vmatpush1.msra.mxu0 0.0
        %1654 = vmatprep.subr.mxu0 0.0
        %1655 = vmatpush1.msra.mxu0 0.0
        %1656 = vmatprep.subr.mxu0 0.0
        %1657 = vmatpush1.msra.mxu0 0.0
        %1658 = vmatprep.subr.mxu0 0.0
        %1659 = vmatpush1.msra.mxu0 0.0
        %1660 = vmatprep.subr.mxu0 0.0
        %1661 = vmatpush1.msra.mxu0 0.0
        %1662 = vmatprep.subr.mxu0 0.0
        %1663 = vmatpush1.msra.mxu0 0.0
        %1664 = vmatprep.subr.mxu0 0.0
        %1665 = vmatpush1.msra.mxu0 0.0
        %1666 = vmatprep.mubr.f32.mxu0 0.0
        %1667 = vmatmul.mubr.f32.gmra.mrb[0].mxu0 %v1555
        %v1668 = vpop.f32.mrb[0].mxu0
        %v1669 = vadd.f32 %v1552, %v1668
        %v1670 = vpop.f32.mrb[0].mxu0
        %1671 = vmatprep.mubr.f32.mxu0 0.0
        %1672 = vmatmul.mubr.f32.gmra.mrb[0].mxu0 %v1558
        %v1673 = vpop.f32.mrb[0].mxu0
        %v1674 = vadd.f32 %v1552, %v1673
        %v1675 = vpop.f32.mrb[0].mxu0
        %1676 = vmatprep.mubr.f32.mxu0 0.0
        %1677 = vmatmul.mubr.f32.gmra.mrb[0].mxu0 %v1561
        %v1678 = vpop.f32.mrb[0].mxu0
        %v1679 = vadd.f32 %v1552, %v1678
        %v1680 = vpop.f32.mrb[0].mxu0
        %1681 = vmatprep.mubr.f32.mxu0 0.0
        %1682 = vmatmul.mubr.f32.gmra.mrb[0].mxu0 %v1564
        %v1683 = vpop.f32.mrb[0].mxu0
        %v1684 = vadd.f32 %v1552, %v1683
        %v1685 = vpop.f32.mrb[0].mxu0
        %1686 = vmatprep.mubr.f32.mxu0 0.0
        %1687 = vmatmul.mubr.f32.gmra.mrb[0].mxu0 %v1567
        %v1688 = vpop.f32.mrb[0].mxu0
        %v1689 = vadd.f32 %v1552, %v1688
        %v1690 = vpop.f32.mrb[0].mxu0
        %1691 = vmatprep.mubr.f32.mxu0 0.0
        %1692 = vmatmul.mubr.f32.gmra.mrb[0].mxu0 %v1570
        %v1693 = vpop.f32.mrb[0].mxu0
        %v1694 = vadd.f32 %v1552, %v1693
        %v1695 = vpop.f32.mrb[0].mxu0
        %1696 = vmatprep.mubr.f32.mxu0 0.0
        %1697 = vmatmul.mubr.f32.gmra.mrb[0].mxu0 %v1573
        %v1698 = vpop.f32.mrb[0].mxu0
        %v1699 = vadd.f32 %v1552, %v1698
        %v1700 = vpop.f32.mrb[0].mxu0
        %1701 = vmatprep.mubr.f32.mxu0 0.0
        %1702 = vmatmul.mubr.f32.gmra.mrb[0].mxu0 %v1576
        %v1703 = vpop.f32.mrb[0].mxu0
        %v1704 = vadd.f32 %v1552, %v1703
        %v1705 = vpop.f32.mrb[0].mxu0
        %1706 = vmatprep.mubr.f32.mxu0 0.0
        %1707 = vmatmul.mubr.f32.gmra.mrb[0].mxu0 %v1579
        %v1708 = vpop.f32.mrb[0].mxu0
        %v1709 = vadd.f32 %v1552, %v1708
        %v1710 = vpop.f32.mrb[0].mxu0
        %1711 = vmatprep.mubr.f32.mxu0 0.0
        %1712 = vmatmul.mubr.f32.gmra.mrb[0].mxu0 %v1582
        %v1713 = vpop.f32.mrb[0].mxu0
        %v1714 = vadd.f32 %v1552, %v1713
        %v1715 = vpop.f32.mrb[0].mxu0
        %1716 = vmatprep.mubr.f32.mxu0 0.0
        %1717 = vmatmul.mubr.f32.gmra.mrb[0].mxu0 %v1585
        %v1718 = vpop.f32.mrb[0].mxu0
        %v1719 = vadd.f32 %v1552, %v1718
        %v1720 = vpop.f32.mrb[0].mxu0
        %1721 = vmatprep.mubr.f32.mxu0 0.0
        %1722 = vmatmul.mubr.f32.gmra.mrb[0].mxu0 %v1588
        %v1723 = vpop.f32.mrb[0].mxu0
        %v1724 = vadd.f32 %v1552, %v1723
        %v1725 = vpop.f32.mrb[0].mxu0
        %1726 = vmatprep.mubr.f32.mxu0 0.0
        %1727 = vmatmul.mubr.f32.gmra.mrb[0].mxu0 %v1591
        %v1728 = vpop.f32.mrb[0].mxu0
        %v1729 = vadd.f32 %v1552, %v1728
        %v1730 = vpop.f32.mrb[0].mxu0
        %1731 = vmatprep.mubr.f32.mxu0 0.0
        %1732 = vmatmul.mubr.f32.gmra.mrb[0].mxu0 %v1594
        %v1733 = vpop.f32.mrb[0].mxu0
        %v1734 = vadd.f32 %v1552, %v1733
        %v1735 = vpop.f32.mrb[0].mxu0
        %1736 = vmatprep.mubr.f32.mxu0 0.0
        %1737 = vmatmul.mubr.f32.gmra.mrb[0].mxu0 %v1597
        %v1738 = vpop.f32.mrb[0].mxu0
        %v1739 = vadd.f32 %v1552, %v1738
        %v1740 = vpop.f32.mrb[0].mxu0
        %1741 = vmatprep.mubr.f32.mxu0 0.0
        %1742 = vmatmul.mubr.f32.gmra.mrb[0].mxu0 %v1600
        %v1743 = vpop.f32.mrb[0].mxu0
        %v1744 = vadd.f32 %v1552, %v1743
        %v1745 = vpop.f32.mrb[0].mxu0
        %1746 = vdwg.mxu0
        %v1747 = vmax.f32 %v1669, 0.0
        %v1748 = vmax.f32 %v1674, 0.0
        %v1749 = vmax.f32 %v1679, 0.0
        %v1750 = vmax.f32 %v1684, 0.0
        %v1751 = vmax.f32 %v1689, 0.0
        %v1752 = vmax.f32 %v1694, 0.0
        %v1753 = vmax.f32 %v1699, 0.0
        %v1754 = vmax.f32 %v1704, 0.0
        %v1755 = vmax.f32 %v1709, 0.0
        %v1756 = vmax.f32 %v1714, 0.0
        %v1757 = vmax.f32 %v1719, 0.0
        %v1758 = vmax.f32 %v1724, 0.0
        %v1759 = vmax.f32 %v1729, 0.0
        %v1760 = vmax.f32 %v1734, 0.0
        %v1761 = vmax.f32 %v1739, 0.0
        %v1762 = vmax.f32 %v1744, 0.0
        %v1763 = vld [vmem:[%s10] sm:$0xff]
        %1764 = vmatprep.subr.mxu0 0.0
        %1765 = vmatpush1.msra.mxu0 %v1747
        %1766 = vmatprep.subr.mxu0 0.0
        %1767 = vmatpush1.msra.mxu0 %v1748
        %1768 = vmatprep.subr.mxu0 0.0
        %1769 = vmatpush1.msra.mxu0 %v1749
        %1770 = vmatprep.subr.mxu0 0.0
        %1771 = vmatpush1.msra.mxu0 %v1750
        %1772 = vmatprep.subr.mxu0 0.0
        %1773 = vmatpush1.msra.mxu0 %v1751
        %1774 = vmatprep.subr.mxu0 0.0
        %1775 = vmatpush1.msra.mxu0 %v1752
        %1776 = vmatprep.subr.mxu0 0.0
        %1777 = vmatpush1.msra.mxu0 %v1753
        %1778 = vmatprep.subr.mxu0 0.0
        %1779 = vmatpush1.msra.mxu0 %v1754
        %1780 = vmatprep.subr.mxu0 0.0
        %1781 = vmatpush1.msra.mxu0 %v1755
        %1782 = vmatprep.subr.mxu0 0.0
        %1783 = vmatpush1.msra.mxu0 %v1756
        %1784 = vmatprep.subr.mxu0 0.0
        %1785 = vmatpush1.msra.mxu0 %v1757
        %1786 = vmatprep.subr.mxu0 0.0
        %1787 = vmatpush1.msra.mxu0 %v1758
        %1788 = vmatprep.subr.mxu0 0.0
        %1789 = vmatpush1.msra.mxu0 %v1759
        %1790 = vmatprep.subr.mxu0 0.0
        %1791 = vmatpush1.msra.mxu0 %v1760
        %1792 = vmatprep.subr.mxu0 0.0
        %1793 = vmatpush1.msra.mxu0 %v1761
        %1794 = vmatprep.subr.mxu0 0.0
        %1795 = vmatpush1.msra.mxu0 %v1762
        %1796 = vmatprep.subr.mxu0 0.0
        %1797 = vmatpush1.msra.mxu0 0.0
        %1798 = vmatprep.subr.mxu0 0.0
        %1799 = vmatpush1.msra.mxu0 0.0
        %1800 = vmatprep.subr.mxu0 0.0
        %1801 = vmatpush1.msra.mxu0 0.0
        %1802 = vmatprep.subr.mxu0 0.0
        %1803 = vmatpush1.msra.mxu0 0.0
        %1804 = vmatprep.subr.mxu0 0.0
        %1805 = vmatpush1.msra.mxu0 0.0
        %1806 = vmatprep.subr.mxu0 0.0
        %1807 = vmatpush1.msra.mxu0 0.0
        %1808 = vmatprep.subr.mxu0 0.0
        %1809 = vmatpush1.msra.mxu0 0.0
        %1810 = vmatprep.subr.mxu0 0.0
        %1811 = vmatpush1.msra.mxu0 0.0
        %1812 = vmatprep.subr.mxu0 0.0
        %1813 = vmatpush1.msra.mxu0 0.0
        %1814 = vmatprep.subr.mxu0 0.0
        %1815 = vmatpush1.msra.mxu0 0.0
        %1816 = vmatprep.subr.mxu0 0.0
        %1817 = vmatpush1.msra.mxu0 0.0
        %1818 = vmatprep.subr.mxu0 0.0
        %1819 = vmatpush1.msra.mxu0 0.0
        %1820 = vmatprep.subr.mxu0 0.0
        %1821 = vmatpush1.msra.mxu0 0.0
        %1822 = vmatprep.subr.mxu0 0.0
        %1823 = vmatpush1.msra.mxu0 0.0
        %1824 = vmatprep.subr.mxu0 0.0
        %1825 = vmatpush1.msra.mxu0 0.0
        %1826 = vmatprep.subr.mxu0 0.0
        %1827 = vmatpush1.msra.mxu0 0.0
        %1828 = vmatprep.mubr.f32.mxu0 0.0
        %1829 = vmatmul.mubr.f32.gmra.mrb[0].mxu0 %v1763
        %v1830 = vpop.f32.mrb[0].mxu0
        %v1831 = vadd.f32 0.0, %v1830
        %v1832 = vpop.f32.mrb[0].mxu0
        %1833 = vdwg.mxu0
        %1834 = vst [vmem:[%s396] sm:$0xff] %v1831
        %s1835 = sand.u32 %s274, 1
        %s1836 = scalar_lea.sflag [#allocation3], %s1835
        %s1837 = sand.u32 %s274, 1
        %s1838 = smul.addr %s1837, 8
        %s1839 = scalar_lea.vmem [#allocation2], %s1838
        // Predicated region
        $region65: #{tpu_custom_call.1} parent=63 // pred_check
          %p1840 = pneg %p284
        $region66: #{tpu_custom_call.1} parent=63 // pred_check_branch
          %1842 = sbr.rel (%p1840) target = $region68
        $region67: #{tpu_custom_call.1} parent=63 // pred_region
          %s1844 = ssub.s32 128, 128
          %1845 = vsyncadd %s1836, %s1844
          %s1846 = smul.addr %s25, 128
          %s1847 = scalar_lea.hbm %s11, %s1846
          %s1849 = sshll.u32 %s1839, 4
          %s1850 = int_to_ptr.vmem [resolvable:$true] %s1849
          %1852 = dma.vmem_to_hbm [thread:$0]  %s1850, 128, %s1847, %s1836
        $region68: #{tpu_custom_call.1} parent=63 // pred_fallthru
          _
      $region64: #{tpu_custom_call.1} parent=5 // pred_fallthru
        _
      %p1853 = scmp.le.s32.totalorder 2, %s20
      // Predicated region
      $region69: #{tpu_custom_call.1} parent=5 // pred_check
        %p1854 = pneg %p1853
      $region70: #{tpu_custom_call.1} parent=5 // pred_check_branch
        %1856 = sbr.rel (%p1854) target = $region72
      $region71: #{tpu_custom_call.1} parent=5 // pred_region
        %s1857 = ssub.s32 %s20, 2
        // Predicated region
        $region73: #{tpu_custom_call.1} parent=71 // pred_check
          %p1858 = pneg %p290
        $region74: #{tpu_custom_call.1} parent=71 // pred_check_branch
          %1860 = sbr.rel (%p1858) target = $region76
        $region75: #{tpu_custom_call.1} parent=71 // pred_region
          %s1861 = sand.u32 %s275, 1
          %s1862 = scalar_lea.sflag [#allocation3], %s1861
          %s1863 = sand.u32 %s275, 1
          %s1864 = smul.addr %s1863, 8
          %s1865 = scalar_lea.vmem [#allocation2], %s1864
          %1866 = dma.done %s1862, 128
        $region76: #{tpu_custom_call.1} parent=71 // pred_fallthru
          _
      $region72: #{tpu_custom_call.1} parent=5 // pred_fallthru
        _
    $region6: #{tpu_custom_call.1} parent=1 // loop_footer
      %s24 = sadd.s32 1, %s20
    $region7: #{tpu_custom_call.1} parent=1 // loop_footer_branch
      %19 = sbr.rel target = $region3
    $region8: #{tpu_custom_call.1} parent=1 // loop_exit
      _
    %1867 = vsyncpa [#allocation3], 1
    %s1868 = scalar_lea.sflag [#allocation3], 1
    %1869 = vsyncpa %s1868, 1

</llo_original>
